<compile_context>
chip_gen: v7x
topology: tpu7x:2x2x1
jax: 0.10.0
libtpu: 0.0.40
codegen_flags: <defaults>
</compile_context>

<pallas_src>
import jax
import jax.numpy as jnp
from jax.experimental import pallas as pl
from jax.experimental.pallas import tpu as pltpu


def _round_up(x, m):
    return ((x + m - 1) // m) * m


def fnn_kernel(x_ref, w1_ref, b1_ref, w2_ref, b2_ref, w3_ref, b3_ref, o_ref):
    """One batch tile of sigmoid(sigmoid(x@W1+b1)@W2+b2)@W3+b3."""
    cdt = w1_ref.dtype  # matmul operand dtype (f32 or bf16)

    # Layer 1: MXU matmul with f32 accumulation, f32 bias add + sigmoid (EUP).
    h1 = jnp.dot(x_ref[...], w1_ref[...], preferred_element_type=jnp.float32)
    h1 = jax.nn.sigmoid(h1 + b1_ref[...]).astype(cdt)

    # Layer 2.
    h2 = jnp.dot(h1, w2_ref[...], preferred_element_type=jnp.float32)
    h2 = jax.nn.sigmoid(h2 + b2_ref[...]).astype(cdt)

    # Layer 3 (no activation), lane-dense store.
    out = jnp.dot(h2, w3_ref[...], preferred_element_type=jnp.float32)
    o_ref[...] = (out + b3_ref[...]).astype(o_ref.dtype)


def fnn_forward(x, w1, b1, w2, b2, w3, b3, *, batch_tile=None,
                compute_dtype=jnp.float32, resident_weights=None):
    orig_dtype = x.dtype
    B, D_in = x.shape
    D_hid = w1.shape[1]
    D_out = w3.shape[1]

    cdt = jnp.dtype(compute_dtype)
    sublane = 16 if cdt == jnp.dtype(jnp.bfloat16) else 8

    # Lane padding to multiples of 128 (full MXU width, unmasked stores).
    D_in_p = _round_up(D_in, 128)
    D_hid_p = _round_up(D_hid, 128)
    D_out_p = _round_up(D_out, 128)

    # Batch tile: target ~512 rows, shrink until the grid has >= 2 steps
    # (pipelining + dual-TC sharding) or we hit the sublane minimum.
    if batch_tile is None:
        batch_tile = 512
        while batch_tile > sublane and _round_up(B, batch_tile) // batch_tile < 2:
            batch_tile //= 2
    batch_tile = max(sublane,
                     _round_up(min(batch_tile, _round_up(B, sublane)), sublane))
    B_p = _round_up(B, batch_tile)
    grid = (B_p // batch_tile,)

    def pad2(a, r, c):
        return jnp.pad(a, ((0, r - a.shape[0]), (0, c - a.shape[1])))

    xp = pad2(x, B_p, D_in_p).astype(cdt)
    w1p = pad2(w1, D_in_p, D_hid_p).astype(cdt)
    w2p = pad2(w2, D_hid_p, D_hid_p).astype(cdt)
    w3p = pad2(w3, D_hid_p, D_out_p).astype(cdt)
    b1p = pad2(b1, 1, D_hid_p).astype(jnp.float32)
    b2p = pad2(b2, 1, D_hid_p).astype(jnp.float32)
    b3p = pad2(b3, 1, D_out_p).astype(jnp.float32)

    cb = cdt.itemsize
    ob = jnp.dtype(orig_dtype).itemsize
    w_bytes = (D_in_p * D_hid_p + D_hid_p * D_hid_p + D_hid_p * D_out_p) * cb
    b_bytes = (2 * D_hid_p + D_out_p) * 4
    x_tile_b = batch_tile * D_in_p * cb
    o_tile_b = batch_tile * D_out_p * ob
    h_bytes = 2 * batch_tile * D_hid_p * 4  # f32 intermediates h1 / h2

    cost = pl.CostEstimate(
        flops=2 * B_p * (D_in_p * D_hid_p + D_hid_p * D_hid_p + D_hid_p * D_out_p),
        transcendentals=2 * B_p * D_hid_p,  # one exp per sigmoid element
        bytes_accessed=B_p * D_in_p * cb + w_bytes + b_bytes + B_p * D_out_p * ob,
    )

    def build(resident):
        if resident:
            # Whole weights/biases pinned in VMEM once for the entire grid:
            # no per-step DMA, no double-buffer copy (matters on v7x's 64 MiB).
            wspecs = [pl.BlockSpec(memory_space=pltpu.MemorySpace.VMEM)
                      for _ in range(6)]
            w_factor = 1
        else:
            # Fallback: constant index_map (Mosaic elides redundant copies but
            # still allocates double buffers).
            wspecs = [
                pl.BlockSpec((D_in_p, D_hid_p), lambda i: (0, 0)),
                pl.BlockSpec((1, D_hid_p), lambda i: (0, 0)),
                pl.BlockSpec((D_hid_p, D_hid_p), lambda i: (0, 0)),
                pl.BlockSpec((1, D_hid_p), lambda i: (0, 0)),
                pl.BlockSpec((D_hid_p, D_out_p), lambda i: (0, 0)),
                pl.BlockSpec((1, D_out_p), lambda i: (0, 0)),
            ]
            w_factor = 2

        in_specs = [pl.BlockSpec((batch_tile, D_in_p), lambda i: (i, 0))] + wspecs
        out_spec = pl.BlockSpec((batch_tile, D_out_p), lambda i: (i, 0))

        needed = (2 * (x_tile_b + o_tile_b)          # double-buffered x / out tiles
                  + w_factor * (w_bytes + b_bytes)   # weights + biases
                  + h_bytes)                         # f32 intermediates
        vmem_limit = int(min(64 * 2**20, max(2 * needed, 32 * 2**20)))

        return pl.pallas_call(
            fnn_kernel,
            out_shape=jax.ShapeDtypeStruct((B_p, D_out_p), orig_dtype),
            grid_spec=pltpu.PrefetchScalarGridSpec(
                num_scalar_prefetch=0,
                grid=grid,
                in_specs=in_specs,
                out_specs=out_spec,
            ),
            compiler_params=pltpu.CompilerParams(
                # Batch tiles are independent -> shard across TensorCores.
                dimension_semantics=("parallel",),
                vmem_limit_bytes=vmem_limit,
            ),
            cost_estimate=cost,
        )

    args = (xp, w1p, b1p, w2p, b2p, w3p, b3p)
    if resident_weights is None:
        try:
            out_p = build(True)(*args)
        except Exception:
            out_p = build(False)(*args)
    else:
        out_p = build(bool(resident_weights))(*args)

    return out_p[:B, :D_out]


def init_params(key, input_dim, hidden_dim, output_dim):
    """PyTorch-style nn.Linear init: U(-1/sqrt(fan_in), 1/sqrt(fan_in))."""
    ks = jax.random.split(key, 6)

    def linear(kw, kb, fan_in, fan_out):
        bound = 1.0 / jnp.sqrt(fan_in)
        w = jax.random.uniform(kw, (fan_in, fan_out), jnp.float32, -bound, bound)
        b = jax.random.uniform(kb, (1, fan_out), jnp.float32, -bound, bound)
        return w, b

    w1, b1 = linear(ks[0], ks[1], input_dim, hidden_dim)
    w2, b2 = linear(ks[2], ks[3], hidden_dim, hidden_dim)
    w3, b3 = linear(ks[4], ks[5], hidden_dim, output_dim)
    return w1, b1, w2, b2, w3, b3


def fnn_reference(x, w1, b1, w2, b2, w3, b3):
    h1 = jax.nn.sigmoid(x @ w1 + b1)
    h2 = jax.nn.sigmoid(h1 @ w2 + b2)
    return h2 @ w3 + b3


if __name__ == "__main__":
    key = jax.random.PRNGKey(0)
    k_x, k_p = jax.random.split(key)

    # Batch large enough to exercise a multi-tile grid (2 tiles of 64 rows).
    batch, input_dim, hidden_dim, output_dim = 128, 16, 32, 8
    x = jax.random.normal(k_x, (batch, input_dim), jnp.float32)
    params = init_params(k_p, input_dim, hidden_dim, output_dim)

    ref = fnn_reference(x, *params)

    # f32 compute path: tight check against reference.
    out_f32 = jax.block_until_ready(
        fnn_forward(x, *params, compute_dtype=jnp.float32))
    assert out_f32.shape == (batch, output_dim)
    assert jnp.allclose(out_f32, ref, atol=1e-4, rtol=1e-4), "f32 mismatch vs reference"

    # bf16 operands with f32 MXU accumulation: looser tolerance.
    out_bf16 = jax.block_until_ready(
        fnn_forward(x, *params, compute_dtype=jnp.bfloat16))
    assert out_bf16.shape == (batch, output_dim)
    assert jnp.allclose(out_bf16, ref, atol=5e-2, rtol=5e-2), "bf16 mismatch vs reference"

    print("KERNEL_OK")
</pallas_src>

<mosaic_0001>
module attributes {stable_mosaic.version = 11 : i64} {
  func.func @fnn_kernel(%arg0: i32, %arg1: memref<64x128xf32, #tpu.memory_space<vmem>>, %arg2: memref<128x128xf32, #tpu.memory_space<vmem>>, %arg3: memref<1x128xf32, #tpu.memory_space<vmem>>, %arg4: memref<128x128xf32, #tpu.memory_space<vmem>>, %arg5: memref<1x128xf32, #tpu.memory_space<vmem>>, %arg6: memref<128x128xf32, #tpu.memory_space<vmem>>, %arg7: memref<1x128xf32, #tpu.memory_space<vmem>>, %arg8: memref<64x128xf32, #tpu.memory_space<vmem>>) attributes {dimension_semantics = [#tpu.dimension_semantics<parallel>], iteration_bounds = array<i64: 2>, scalar_prefetch = 0 : i64, scratch_operands = 0 : i64, tpu.core_type = #tpu.core_type<tc>, window_params = [{transform_indices = @transform_0, window_bounds = array<i64: 64, 128>}, {pipeline_mode = #tpu.pipeline_mode<synchronous>, transform_indices = @transform_1, window_bounds = array<i64: 128, 128>}, {pipeline_mode = #tpu.pipeline_mode<synchronous>, transform_indices = @transform_2, window_bounds = array<i64: 1, 128>}, {pipeline_mode = #tpu.pipeline_mode<synchronous>, transform_indices = @transform_3, window_bounds = array<i64: 128, 128>}, {pipeline_mode = #tpu.pipeline_mode<synchronous>, transform_indices = @transform_4, window_bounds = array<i64: 1, 128>}, {pipeline_mode = #tpu.pipeline_mode<synchronous>, transform_indices = @transform_5, window_bounds = array<i64: 128, 128>}, {pipeline_mode = #tpu.pipeline_mode<synchronous>, transform_indices = @transform_6, window_bounds = array<i64: 1, 128>}, {transform_indices = @transform_7, window_bounds = array<i64: 64, 128>}]} {
    %c0 = arith.constant 0 : index
    %c0_0 = arith.constant 0 : index
    %0 = vector.load %arg1[%c0, %c0_0] : memref<64x128xf32, #tpu.memory_space<vmem>>, vector<64x128xf32>
    %c0_1 = arith.constant 0 : index
    %c0_2 = arith.constant 0 : index
    %1 = vector.load %arg2[%c0_1, %c0_2] : memref<128x128xf32, #tpu.memory_space<vmem>>, vector<128x128xf32>
    %cst = arith.constant dense<0.000000e+00> : vector<64x128xf32>
    %2 = tpu.matmul %0, %1, %cst {dimension_numbers = #tpu.dot_dimension_numbers<[1], [0], [0], [1], [0, 0, 1, 1], [], []>} : vector<64x128xf32>, vector<128x128xf32>, vector<64x128xf32> -> vector<64x128xf32>
    %c0_3 = arith.constant 0 : index
    %c0_4 = arith.constant 0 : index
    %3 = vector.load %arg3[%c0_3, %c0_4] : memref<1x128xf32, #tpu.memory_space<vmem>>, vector<1x128xf32>
    %4 = vector.broadcast %3 : vector<1x128xf32> to vector<64x128xf32>
    %5 = arith.addf %2, %4 : vector<64x128xf32>
    %6 = arith.negf %5 : vector<64x128xf32>
    %7 = math.exp %6 : vector<64x128xf32>
    %cst_5 = arith.constant 1.000000e+00 : f32
    %8 = vector.broadcast %cst_5 : f32 to vector<64x128xf32>
    %9 = arith.addf %8, %7 : vector<64x128xf32>
    %10 = arith.divf %8, %9 : vector<64x128xf32>
    %c0_6 = arith.constant 0 : index
    %c0_7 = arith.constant 0 : index
    %11 = vector.load %arg4[%c0_6, %c0_7] : memref<128x128xf32, #tpu.memory_space<vmem>>, vector<128x128xf32>
    %cst_8 = arith.constant dense<0.000000e+00> : vector<64x128xf32>
    %12 = tpu.matmul %10, %11, %cst_8 {dimension_numbers = #tpu.dot_dimension_numbers<[1], [0], [0], [1], [0, 0, 1, 1], [], []>} : vector<64x128xf32>, vector<128x128xf32>, vector<64x128xf32> -> vector<64x128xf32>
    %c0_9 = arith.constant 0 : index
    %c0_10 = arith.constant 0 : index
    %13 = vector.load %arg5[%c0_9, %c0_10] : memref<1x128xf32, #tpu.memory_space<vmem>>, vector<1x128xf32>
    %14 = vector.broadcast %13 : vector<1x128xf32> to vector<64x128xf32>
    %15 = arith.addf %12, %14 : vector<64x128xf32>
    %16 = arith.negf %15 : vector<64x128xf32>
    %17 = math.exp %16 : vector<64x128xf32>
    %cst_11 = arith.constant 1.000000e+00 : f32
    %18 = vector.broadcast %cst_11 : f32 to vector<64x128xf32>
    %19 = arith.addf %18, %17 : vector<64x128xf32>
    %20 = arith.divf %18, %19 : vector<64x128xf32>
    %c0_12 = arith.constant 0 : index
    %c0_13 = arith.constant 0 : index
    %21 = vector.load %arg6[%c0_12, %c0_13] : memref<128x128xf32, #tpu.memory_space<vmem>>, vector<128x128xf32>
    %cst_14 = arith.constant dense<0.000000e+00> : vector<64x128xf32>
    %22 = tpu.matmul %20, %21, %cst_14 {dimension_numbers = #tpu.dot_dimension_numbers<[1], [0], [0], [1], [0, 0, 1, 1], [], []>} : vector<64x128xf32>, vector<128x128xf32>, vector<64x128xf32> -> vector<64x128xf32>
    %c0_15 = arith.constant 0 : index
    %c0_16 = arith.constant 0 : index
    %23 = vector.load %arg7[%c0_15, %c0_16] : memref<1x128xf32, #tpu.memory_space<vmem>>, vector<1x128xf32>
    %24 = vector.broadcast %23 : vector<1x128xf32> to vector<64x128xf32>
    %25 = arith.addf %22, %24 : vector<64x128xf32>
    %c0_17 = arith.constant 0 : index
    %c0_18 = arith.constant 0 : index
    %26 = vector.load %arg8[%c0_17, %c0_18] : memref<64x128xf32, #tpu.memory_space<vmem>>, vector<64x128xf32>
    tpu.vector_store %arg8[%c0_17, %c0_18], %25 {strides = array<i32>} : memref<64x128xf32, #tpu.memory_space<vmem>>, vector<64x128xf32>,
    return
  }
  func.func @transform_0(%arg0: i32) -> (i32, i32) {
    %c0_i32 = arith.constant 0 : i32
    %c0_i32_0 = arith.constant 0 : i32
    return %arg0, %c0_i32 : i32, i32
  }
  func.func @transform_1(%arg0: i32) -> (i32, i32) {
    %c0_i32 = arith.constant 0 : i32
    %c0_i32_0 = arith.constant 0 : i32
    %c0_i32_1 = arith.constant 0 : i32
    return %c0_i32, %c0_i32_0 : i32, i32
  }
  func.func @transform_2(%arg0: i32) -> (i32, i32) {
    %c0_i32 = arith.constant 0 : i32
    %c0_i32_0 = arith.constant 0 : i32
    %c0_i32_1 = arith.constant 0 : i32
    return %c0_i32, %c0_i32_0 : i32, i32
  }
  func.func @transform_3(%arg0: i32) -> (i32, i32) {
    %c0_i32 = arith.constant 0 : i32
    %c0_i32_0 = arith.constant 0 : i32
    %c0_i32_1 = arith.constant 0 : i32
    return %c0_i32, %c0_i32_0 : i32, i32
  }
  func.func @transform_4(%arg0: i32) -> (i32, i32) {
    %c0_i32 = arith.constant 0 : i32
    %c0_i32_0 = arith.constant 0 : i32
    %c0_i32_1 = arith.constant 0 : i32
    return %c0_i32, %c0_i32_0 : i32, i32
  }
  func.func @transform_5(%arg0: i32) -> (i32, i32) {
    %c0_i32 = arith.constant 0 : i32
    %c0_i32_0 = arith.constant 0 : i32
    %c0_i32_1 = arith.constant 0 : i32
    return %c0_i32, %c0_i32_0 : i32, i32
  }
  func.func @transform_6(%arg0: i32) -> (i32, i32) {
    %c0_i32 = arith.constant 0 : i32
    %c0_i32_0 = arith.constant 0 : i32
    %c0_i32_1 = arith.constant 0 : i32
    return %c0_i32, %c0_i32_0 : i32, i32
  }
  func.func @transform_7(%arg0: i32) -> (i32, i32) {
    %c0_i32 = arith.constant 0 : i32
    %c0_i32_0 = arith.constant 0 : i32
    return %arg0, %c0_i32 : i32, i32
  }
}

module attributes {stable_mosaic.version = 11 : i64} {
  func.func @fnn_kernel(%arg0: i32, %arg1: memref<64x128xf32, #tpu.memory_space<vmem>>, %arg2: memref<128x128xf32, #tpu.memory_space<vmem>>, %arg3: memref<1x128xf32, #tpu.memory_space<vmem>>, %arg4: memref<128x128xf32, #tpu.memory_space<vmem>>, %arg5: memref<1x128xf32, #tpu.memory_space<vmem>>, %arg6: memref<128x128xf32, #tpu.memory_space<vmem>>, %arg7: memref<1x128xf32, #tpu.memory_space<vmem>>, %arg8: memref<64x128xf32, #tpu.memory_space<vmem>>) attributes {dimension_semantics = [#tpu.dimension_semantics<parallel>], iteration_bounds = array<i64: 2>, scalar_prefetch = 0 : i64, scratch_operands = 0 : i64, tpu.core_type = #tpu.core_type<tc>, window_params = [{transform_indices = @transform_0, window_bounds = array<i64: 64, 128>}, {pipeline_mode = #tpu.pipeline_mode<synchronous>, transform_indices = @transform_1, window_bounds = array<i64: 128, 128>}, {pipeline_mode = #tpu.pipeline_mode<synchronous>, transform_indices = @transform_2, window_bounds = array<i64: 1, 128>}, {pipeline_mode = #tpu.pipeline_mode<synchronous>, transform_indices = @transform_3, window_bounds = array<i64: 128, 128>}, {pipeline_mode = #tpu.pipeline_mode<synchronous>, transform_indices = @transform_4, window_bounds = array<i64: 1, 128>}, {pipeline_mode = #tpu.pipeline_mode<synchronous>, transform_indices = @transform_5, window_bounds = array<i64: 128, 128>}, {pipeline_mode = #tpu.pipeline_mode<synchronous>, transform_indices = @transform_6, window_bounds = array<i64: 1, 128>}, {transform_indices = @transform_7, window_bounds = array<i64: 64, 128>}]} {
    %c0 = arith.constant 0 : index
    %c0_0 = arith.constant 0 : index
    %0 = vector.load %arg1[%c0, %c0_0] : memref<64x128xf32, #tpu.memory_space<vmem>>, vector<64x128xf32>
    %c0_1 = arith.constant 0 : index
    %c0_2 = arith.constant 0 : index
    %1 = vector.load %arg2[%c0_1, %c0_2] : memref<128x128xf32, #tpu.memory_space<vmem>>, vector<128x128xf32>
    %cst = arith.constant dense<0.000000e+00> : vector<64x128xf32>
    %2 = tpu.matmul %0, %1, %cst {dimension_numbers = #tpu.dot_dimension_numbers<[1], [0], [0], [1], [0, 0, 1, 1], [], []>} : vector<64x128xf32>, vector<128x128xf32>, vector<64x128xf32> -> vector<64x128xf32>
    %c0_3 = arith.constant 0 : index
    %c0_4 = arith.constant 0 : index
    %3 = vector.load %arg3[%c0_3, %c0_4] : memref<1x128xf32, #tpu.memory_space<vmem>>, vector<1x128xf32>
    %4 = vector.broadcast %3 : vector<1x128xf32> to vector<64x128xf32>
    %5 = arith.addf %2, %4 : vector<64x128xf32>
    %6 = arith.negf %5 : vector<64x128xf32>
    %7 = math.exp %6 : vector<64x128xf32>
    %cst_5 = arith.constant 1.000000e+00 : f32
    %8 = vector.broadcast %cst_5 : f32 to vector<64x128xf32>
    %9 = arith.addf %8, %7 : vector<64x128xf32>
    %10 = arith.divf %8, %9 : vector<64x128xf32>
    %c0_6 = arith.constant 0 : index
    %c0_7 = arith.constant 0 : index
    %11 = vector.load %arg4[%c0_6, %c0_7] : memref<128x128xf32, #tpu.memory_space<vmem>>, vector<128x128xf32>
    %cst_8 = arith.constant dense<0.000000e+00> : vector<64x128xf32>
    %12 = tpu.matmul %10, %11, %cst_8 {dimension_numbers = #tpu.dot_dimension_numbers<[1], [0], [0], [1], [0, 0, 1, 1], [], []>} : vector<64x128xf32>, vector<128x128xf32>, vector<64x128xf32> -> vector<64x128xf32>
    %c0_9 = arith.constant 0 : index
    %c0_10 = arith.constant 0 : index
    %13 = vector.load %arg5[%c0_9, %c0_10] : memref<1x128xf32, #tpu.memory_space<vmem>>, vector<1x128xf32>
    %14 = vector.broadcast %13 : vector<1x128xf32> to vector<64x128xf32>
    %15 = arith.addf %12, %14 : vector<64x128xf32>
    %16 = arith.negf %15 : vector<64x128xf32>
    %17 = math.exp %16 : vector<64x128xf32>
    %cst_11 = arith.constant 1.000000e+00 : f32
    %18 = vector.broadcast %cst_11 : f32 to vector<64x128xf32>
    %19 = arith.addf %18, %17 : vector<64x128xf32>
    %20 = arith.divf %18, %19 : vector<64x128xf32>
    %c0_12 = arith.constant 0 : index
    %c0_13 = arith.constant 0 : index
    %21 = vector.load %arg6[%c0_12, %c0_13] : memref<128x128xf32, #tpu.memory_space<vmem>>, vector<128x128xf32>
    %cst_14 = arith.constant dense<0.000000e+00> : vector<64x128xf32>
    %22 = tpu.matmul %20, %21, %cst_14 {dimension_numbers = #tpu.dot_dimension_numbers<[1], [0], [0], [1], [0, 0, 1, 1], [], []>} : vector<64x128xf32>, vector<128x128xf32>, vector<64x128xf32> -> vector<64x128xf32>
    %c0_15 = arith.constant 0 : index
    %c0_16 = arith.constant 0 : index
    %23 = vector.load %arg7[%c0_15, %c0_16] : memref<1x128xf32, #tpu.memory_space<vmem>>, vector<1x128xf32>
    %24 = vector.broadcast %23 : vector<1x128xf32> to vector<64x128xf32>
    %25 = arith.addf %22, %24 : vector<64x128xf32>
    %c0_17 = arith.constant 0 : index
    %c0_18 = arith.constant 0 : index
    %26 = vector.load %arg8[%c0_17, %c0_18] : memref<64x128xf32, #tpu.memory_space<vmem>>, vector<64x128xf32>
    tpu.vector_store %arg8[%c0_17, %c0_18], %25 {strides = array<i32>} : memref<64x128xf32, #tpu.memory_space<vmem>>, vector<64x128xf32>,
    return
  }
  func.func @transform_0(%arg0: i32) -> (i32, i32) {
    %c0_i32 = arith.constant 0 : i32
    %c0_i32_0 = arith.constant 0 : i32
    return %arg0, %c0_i32 : i32, i32
  }
  func.func @transform_1(%arg0: i32) -> (i32, i32) {
    %c0_i32 = arith.constant 0 : i32
    %c0_i32_0 = arith.constant 0 : i32
    %c0_i32_1 = arith.constant 0 : i32
    return %c0_i32, %c0_i32_0 : i32, i32
  }
  func.func @transform_2(%arg0: i32) -> (i32, i32) {
    %c0_i32 = arith.constant 0 : i32
    %c0_i32_0 = arith.constant 0 : i32
    %c0_i32_1 = arith.constant 0 : i32
    return %c0_i32, %c0_i32_0 : i32, i32
  }
  func.func @transform_3(%arg0: i32) -> (i32, i32) {
    %c0_i32 = arith.constant 0 : i32
    %c0_i32_0 = arith.constant 0 : i32
    %c0_i32_1 = arith.constant 0 : i32
    return %c0_i32, %c0_i32_0 : i32, i32
  }
  func.func @transform_4(%arg0: i32) -> (i32, i32) {
    %c0_i32 = arith.constant 0 : i32
    %c0_i32_0 = arith.constant 0 : i32
    %c0_i32_1 = arith.constant 0 : i32
    return %c0_i32, %c0_i32_0 : i32, i32
  }
  func.func @transform_5(%arg0: i32) -> (i32, i32) {
    %c0_i32 = arith.constant 0 : i32
    %c0_i32_0 = arith.constant 0 : i32
    %c0_i32_1 = arith.constant 0 : i32
    return %c0_i32, %c0_i32_0 : i32, i32
  }
  func.func @transform_6(%arg0: i32) -> (i32, i32) {
    %c0_i32 = arith.constant 0 : i32
    %c0_i32_0 = arith.constant 0 : i32
    %c0_i32_1 = arith.constant 0 : i32
    return %c0_i32, %c0_i32_0 : i32, i32
  }
  func.func @transform_7(%arg0: i32) -> (i32, i32) {
    %c0_i32 = arith.constant 0 : i32
    %c0_i32_0 = arith.constant 0 : i32
    return %arg0, %c0_i32 : i32, i32
  }
}

</mosaic_0001>

<llo_original>
// kernel: tpu_custom_call.1
$region0: #{tpu_custom_call.1}
  #allocation0 [shape = 'u32[]', space=smem, size = 0x4, offset = 0x4, fixed_abs, tag = 'smem constant byte address 0x4 - core index']
  #allocation1 [shape = 'u32[144,128]{1,0:T(1,128)}', space=vmem, size = 0x12000, scoped, tag = 'internal scratch']
  %s0 = inlined_call_operand.hbm [shape: f32[128,128], index: 0, kind: input, shape index: {}]
  %s1 = inlined_call_operand.hbm [shape: f32[128,128], index: 1, kind: input, shape index: {}]
  %s2 = inlined_call_operand.vmem [shape: f32[1,128], index: 2, kind: input, shape index: {}]
  %s3 = inlined_call_operand.hbm [shape: f32[128,128], index: 3, kind: input, shape index: {}]
  %s4 = inlined_call_operand.vmem [shape: f32[1,128], index: 4, kind: input, shape index: {}]
  %s5 = inlined_call_operand.hbm [shape: f32[128,128], index: 5, kind: input, shape index: {}]
  %s6 = inlined_call_operand.vmem [shape: f32[1,128], index: 6, kind: input, shape index: {}]
  %s7 = inlined_call_operand.hbm [shape: f32[128,128], index: 7, kind: output, shape index: {}]
  %s8 = sld [smem:[#allocation0]]
  $region77: #{tpu_custom_call.1} parent=0
    _
  %s10 = ssub.s32 1, %s8
  %s11 = scalar_select 0, %s10, %s8
  $region1: #{tpu_custom_call.1} parent=0
    #allocation2 [shape = 'u8[65536]{0}', space=vmem, size = 0x10000, scoped, tag = 'input window, operand 0']
    #allocation3 [shape = 's32[2]{0}', space=sflag, size = 0x8, scoped, tag = 'scoped memory for tpu_custom_call.1']
    #allocation4 [shape = 's32[2]{0}', space=sflag, size = 0x8, scoped, tag = 'scoped memory for tpu_custom_call.1']
    #allocation5 [shape = 'u8[65536]{0}', space=vmem, size = 0x10000, scoped, tag = 'input window, operand 1, single buffered']
    #allocation6 [shape = 's32[1]{0}', space=sflag, size = 0x4, scoped, tag = 'scoped memory for tpu_custom_call.1']
    #allocation7 [shape = 'u8[65536]{0}', space=vmem, size = 0x10000, scoped, tag = 'input window, operand 3, single buffered']
    #allocation8 [shape = 'u8[65536]{0}', space=vmem, size = 0x10000, scoped, tag = 'input window, operand 5, single buffered']
    #allocation9 [shape = 's32[1]{0}', space=sflag, size = 0x4, scoped, tag = 'scoped memory for tpu_custom_call.1']
    #allocation10 [shape = 'u8[65536]{0}', space=vmem, size = 0x10000, scoped, tag = 'output window, operand 0']
    %12 = vsyncpa [#allocation3], 0
    %s13 = scalar_lea.sflag [#allocation3], 1
    %14 = vsyncpa %s13, 0
    %15 = vsyncpa [#allocation6], 0
    %16 = vsyncpa [#allocation9], 0
    %17 = vsyncpa [#allocation4], 0
    %s18 = scalar_lea.sflag [#allocation4], 1
    %19 = vsyncpa %s18, 0
    loop: start=0, step=1, limit=4
    $region2: #{tpu_custom_call.1} parent=1 // loop_pre_header
      _
    $region3: #{tpu_custom_call.1} parent=1 // loop_header
      %s21 = sphi 0, %s25
      %p22 = scmp.ge.s32.totalorder %s21, 4
      %s31 = sphi 0, %s33
      %s34 = sphi 0, %s31
      %s35 = sphi 0, %s34
      %s51 = sphi 0, %s35
      %s55 = sphi 0, %s55
      %s57 = sphi 0, %s55
      %s58 = sphi 0, %s57
      %s72 = sphi 0, %s58
      %s76 = sphi 0, %s76
      %s78 = sphi 0, %s76
      %s79 = sphi 0, %s78
      %s93 = sphi 0, %s79
      %s97 = sphi 0, %s97
      %s99 = sphi 0, %s97
      %s100 = sphi 0, %s99
      %s114 = sphi 0, %s100
      %s118 = sphi 0, %s118
      %s120 = sphi 0, %s118
      %s121 = sphi 0, %s120
      %s135 = sphi 0, %s121
      %s139 = sphi 0, %s139
      %s141 = sphi 0, %s139
      %s142 = sphi 0, %s141
      %s156 = sphi 0, %s142
      %s160 = sphi 0, %s160
      %s162 = sphi 0, %s160
      %s163 = sphi 0, %s162
      %s177 = sphi 0, %s163
      %s183 = sphi 0, %s185
      %s186 = sphi 0, %s183
      %s187 = sphi 0, %s186
      %s203 = sphi 0, %s187
    $region4: #{tpu_custom_call.1} parent=1 // loop_header_branch
      %24 = sbr.rel (%p22) target = $region8
    $region5: #{tpu_custom_call.1} parent=1 // loop_body
      %s26 = ssub.s32 %s21, 1
      %s27 = ssub.s32 %s21, 2
      %s28 = sadd.s32 %s21, 1
      %s29 = ssub.s32 %s21, %s28
      %p30 = scmp.eq.s32.totalorder %s29, 0
      %s32 = sadd.s32 %s31, 1
      %s33 = scalar_select %p30, %s31, %s32
      %p36 = pneg %p30
      %p37 = scmp.eq.s32.totalorder %s21, 1
      %p38 = por %p36, %p37
      %p39 = scmp.ne.s32.totalorder %s31, %s34
      %p40 = scmp.eq.s32.totalorder %s21, 0
      %p41 = por %p39, %p40
      %p42 = scmp.ne.s32.totalorder %s31, %s34
      %p43 = scmp.eq.s32.totalorder %s26, 1
      %p44 = por %p42, %p43
      %p45 = scmp.ne.s32.totalorder %s34, %s35
      %p46 = scmp.eq.s32.totalorder %s26, 0
      %p47 = por %p45, %p46
      %p48 = scmp.ne.s32.totalorder %s34, %s35
      %p49 = scmp.eq.s32.totalorder %s27, 1
      %p50 = por %p48, %p49
      %p52 = scmp.ne.s32.totalorder %s35, %s51
      %p53 = scmp.eq.s32.totalorder %s27, 0
      %p54 = por %p52, %p53
      %s56 = sadd.s32 %s55, 1
      %p59 = scmp.eq.s32.totalorder %s21, 1
      %p60 = scmp.ne.s32.totalorder %s55, %s57
      %p61 = scmp.eq.s32.totalorder %s21, 0
      %p62 = por %p60, %p61
      %p63 = scmp.ne.s32.totalorder %s55, %s57
      %p64 = scmp.eq.s32.totalorder %s26, 1
      %p65 = por %p63, %p64
      %p66 = scmp.ne.s32.totalorder %s57, %s58
      %p67 = scmp.eq.s32.totalorder %s26, 0
      %p68 = por %p66, %p67
      %p69 = scmp.ne.s32.totalorder %s57, %s58
      %p70 = scmp.eq.s32.totalorder %s27, 1
      %p71 = por %p69, %p70
      %p73 = scmp.ne.s32.totalorder %s58, %s72
      %p74 = scmp.eq.s32.totalorder %s27, 0
      %p75 = por %p73, %p74
      %s77 = sadd.s32 %s76, 1
      %p80 = scmp.eq.s32.totalorder %s21, 1
      %p81 = scmp.ne.s32.totalorder %s76, %s78
      %p82 = scmp.eq.s32.totalorder %s21, 0
      %p83 = por %p81, %p82
      %p84 = scmp.ne.s32.totalorder %s76, %s78
      %p85 = scmp.eq.s32.totalorder %s26, 1
      %p86 = por %p84, %p85
      %p87 = scmp.ne.s32.totalorder %s78, %s79
      %p88 = scmp.eq.s32.totalorder %s26, 0
      %p89 = por %p87, %p88
      %p90 = scmp.ne.s32.totalorder %s78, %s79
      %p91 = scmp.eq.s32.totalorder %s27, 1
      %p92 = por %p90, %p91
      %p94 = scmp.ne.s32.totalorder %s79, %s93
      %p95 = scmp.eq.s32.totalorder %s27, 0
      %p96 = por %p94, %p95
      %s98 = sadd.s32 %s97, 1
      %p101 = scmp.eq.s32.totalorder %s21, 1
      %p102 = scmp.ne.s32.totalorder %s97, %s99
      %p103 = scmp.eq.s32.totalorder %s21, 0
      %p104 = por %p102, %p103
      %p105 = scmp.ne.s32.totalorder %s97, %s99
      %p106 = scmp.eq.s32.totalorder %s26, 1
      %p107 = por %p105, %p106
      %p108 = scmp.ne.s32.totalorder %s99, %s100
      %p109 = scmp.eq.s32.totalorder %s26, 0
      %p110 = por %p108, %p109
      %p111 = scmp.ne.s32.totalorder %s99, %s100
      %p112 = scmp.eq.s32.totalorder %s27, 1
      %p113 = por %p111, %p112
      %p115 = scmp.ne.s32.totalorder %s100, %s114
      %p116 = scmp.eq.s32.totalorder %s27, 0
      %p117 = por %p115, %p116
      %s119 = sadd.s32 %s118, 1
      %p122 = scmp.eq.s32.totalorder %s21, 1
      %p123 = scmp.ne.s32.totalorder %s118, %s120
      %p124 = scmp.eq.s32.totalorder %s21, 0
      %p125 = por %p123, %p124
      %p126 = scmp.ne.s32.totalorder %s118, %s120
      %p127 = scmp.eq.s32.totalorder %s26, 1
      %p128 = por %p126, %p127
      %p129 = scmp.ne.s32.totalorder %s120, %s121
      %p130 = scmp.eq.s32.totalorder %s26, 0
      %p131 = por %p129, %p130
      %p132 = scmp.ne.s32.totalorder %s120, %s121
      %p133 = scmp.eq.s32.totalorder %s27, 1
      %p134 = por %p132, %p133
      %p136 = scmp.ne.s32.totalorder %s121, %s135
      %p137 = scmp.eq.s32.totalorder %s27, 0
      %p138 = por %p136, %p137
      %s140 = sadd.s32 %s139, 1
      %p143 = scmp.eq.s32.totalorder %s21, 1
      %p144 = scmp.ne.s32.totalorder %s139, %s141
      %p145 = scmp.eq.s32.totalorder %s21, 0
      %p146 = por %p144, %p145
      %p147 = scmp.ne.s32.totalorder %s139, %s141
      %p148 = scmp.eq.s32.totalorder %s26, 1
      %p149 = por %p147, %p148
      %p150 = scmp.ne.s32.totalorder %s141, %s142
      %p151 = scmp.eq.s32.totalorder %s26, 0
      %p152 = por %p150, %p151
      %p153 = scmp.ne.s32.totalorder %s141, %s142
      %p154 = scmp.eq.s32.totalorder %s27, 1
      %p155 = por %p153, %p154
      %p157 = scmp.ne.s32.totalorder %s142, %s156
      %p158 = scmp.eq.s32.totalorder %s27, 0
      %p159 = por %p157, %p158
      %s161 = sadd.s32 %s160, 1
      %p164 = scmp.eq.s32.totalorder %s21, 1
      %p165 = scmp.ne.s32.totalorder %s160, %s162
      %p166 = scmp.eq.s32.totalorder %s21, 0
      %p167 = por %p165, %p166
      %p168 = scmp.ne.s32.totalorder %s160, %s162
      %p169 = scmp.eq.s32.totalorder %s26, 1
      %p170 = por %p168, %p169
      %p171 = scmp.ne.s32.totalorder %s162, %s163
      %p172 = scmp.eq.s32.totalorder %s26, 0
      %p173 = por %p171, %p172
      %p174 = scmp.ne.s32.totalorder %s162, %s163
      %p175 = scmp.eq.s32.totalorder %s27, 1
      %p176 = por %p174, %p175
      %p178 = scmp.ne.s32.totalorder %s163, %s177
      %p179 = scmp.eq.s32.totalorder %s27, 0
      %p180 = por %p178, %p179
      %s181 = ssub.s32 %s21, %s28
      %p182 = scmp.eq.s32.totalorder %s181, 0
      %s184 = sadd.s32 %s183, 1
      %s185 = scalar_select %p182, %s183, %s184
      %p188 = pneg %p182
      %p189 = scmp.eq.s32.totalorder %s21, 1
      %p190 = por %p188, %p189
      %p191 = scmp.ne.s32.totalorder %s183, %s186
      %p192 = scmp.eq.s32.totalorder %s21, 0
      %p193 = por %p191, %p192
      %p194 = scmp.ne.s32.totalorder %s183, %s186
      %p195 = scmp.eq.s32.totalorder %s26, 1
      %p196 = por %p194, %p195
      %p197 = scmp.ne.s32.totalorder %s186, %s187
      %p198 = scmp.eq.s32.totalorder %s26, 0
      %p199 = por %p197, %p198
      %p200 = scmp.ne.s32.totalorder %s186, %s187
      %p201 = scmp.eq.s32.totalorder %s27, 1
      %p202 = por %p200, %p201
      %p204 = scmp.ne.s32.totalorder %s187, %s203
      %p205 = scmp.eq.s32.totalorder %s27, 0
      %p206 = por %p204, %p205
      %p207 = scmp.le.s32.totalorder 1, %s21
      %p208 = scmp.lt.s32.totalorder %s21, 3
      %p209 = pnand %p207, %p208
      %p210 = pneg %p209
      // Predicated region
      $region9: #{tpu_custom_call.1} parent=5 // pred_check
        _
      $region10: #{tpu_custom_call.1} parent=5 // pred_check_branch
        %212 = sbr.rel (%p209) target = $region12
      $region11: #{tpu_custom_call.1} parent=5 // pred_region
        %s213 = ssub.s32 %s21, 1
        // Predicated region
        $region13: #{tpu_custom_call.1} parent=11 // pred_check
          %p214 = pneg %p68
        $region14: #{tpu_custom_call.1} parent=11 // pred_check_branch
          %216 = sbr.rel (%p214) target = $region16
        $region15: #{tpu_custom_call.1} parent=11 // pred_region
          %s218 = ssub.s32 2048, 2048
          %219 = vsyncadd [#allocation6], %s218
          %s220 = sshll.u32 [#allocation5], 4
          %s221 = int_to_ptr.vmem [resolvable:$true] %s220
          %226 = dma.hbm_to_vmem [thread:$0]  %s1, 2048, %s221, [#allocation6], 128, 128, 8
        $region16: #{tpu_custom_call.1} parent=11 // pred_fallthru
          _
        // Predicated region
        $region17: #{tpu_custom_call.1} parent=11 // pred_check
          %p227 = pneg %p89
        $region18: #{tpu_custom_call.1} parent=11 // pred_check_branch
          %229 = sbr.rel (%p227) target = $region20
        $region19: #{tpu_custom_call.1} parent=11 // pred_region
          _
        $region20: #{tpu_custom_call.1} parent=11 // pred_fallthru
          _
        // Predicated region
        $region21: #{tpu_custom_call.1} parent=11 // pred_check
          %p230 = pneg %p110
        $region22: #{tpu_custom_call.1} parent=11 // pred_check_branch
          %232 = sbr.rel (%p230) target = $region24
        $region23: #{tpu_custom_call.1} parent=11 // pred_region
          %s234 = ssub.s32 2048, 2048
          %235 = vsyncadd [#allocation6], %s234
          %s236 = sshll.u32 [#allocation7], 4
          %s237 = int_to_ptr.vmem [resolvable:$true] %s236
          %242 = dma.hbm_to_vmem [thread:$0]  %s3, 2048, %s237, [#allocation6], 128, 128, 8
        $region24: #{tpu_custom_call.1} parent=11 // pred_fallthru
          _
        // Predicated region
        $region25: #{tpu_custom_call.1} parent=11 // pred_check
          %p243 = pneg %p131
        $region26: #{tpu_custom_call.1} parent=11 // pred_check_branch
          %245 = sbr.rel (%p243) target = $region28
        $region27: #{tpu_custom_call.1} parent=11 // pred_region
          _
        $region28: #{tpu_custom_call.1} parent=11 // pred_fallthru
          _
        // Predicated region
        $region29: #{tpu_custom_call.1} parent=11 // pred_check
          %p246 = pneg %p152
        $region30: #{tpu_custom_call.1} parent=11 // pred_check_branch
          %248 = sbr.rel (%p246) target = $region32
        $region31: #{tpu_custom_call.1} parent=11 // pred_region
          %s250 = ssub.s32 2048, 2048
          %251 = vsyncadd [#allocation9], %s250
          %s252 = sshll.u32 [#allocation8], 4
          %s253 = int_to_ptr.vmem [resolvable:$true] %s252
          %258 = dma.hbm_to_vmem [thread:$0]  %s5, 2048, %s253, [#allocation9], 128, 128, 8
        $region32: #{tpu_custom_call.1} parent=11 // pred_fallthru
          _
        // Predicated region
        $region33: #{tpu_custom_call.1} parent=11 // pred_check
          %p259 = pneg %p173
        $region34: #{tpu_custom_call.1} parent=11 // pred_check_branch
          %261 = sbr.rel (%p259) target = $region36
        $region35: #{tpu_custom_call.1} parent=11 // pred_region
          _
        $region36: #{tpu_custom_call.1} parent=11 // pred_fallthru
          _
      $region12: #{tpu_custom_call.1} parent=5 // pred_fallthru
        _
      %p262 = scmp.lt.s32.totalorder %s21, 2
      // Predicated region
      $region37: #{tpu_custom_call.1} parent=5 // pred_check
        %p263 = pneg %p262
      $region38: #{tpu_custom_call.1} parent=5 // pred_check_branch
        %265 = sbr.rel (%p263) target = $region40
      $region39: #{tpu_custom_call.1} parent=5 // pred_region
        // Predicated region
        $region41: #{tpu_custom_call.1} parent=39 // pred_check
          %p266 = pneg %p41
        $region42: #{tpu_custom_call.1} parent=39 // pred_check_branch
          %268 = sbr.rel (%p266) target = $region44
        $region43: #{tpu_custom_call.1} parent=39 // pred_region
          %s269 = sand.u32 %s31, 1
          %s270 = scalar_lea.sflag [#allocation3], %s269
          %s271 = sand.u32 %s31, 1
          %s272 = smul.addr %s271, 64
          %s273 = scalar_lea.vmem [#allocation2], %s272
          %s274 = smul.u32 8, %s21
          %s276 = ssub.s32 1024, 1024
          %277 = vsyncadd %s270, %s276
          %s278 = smul.addr %s274, 128
          %s279 = scalar_lea.hbm %s0, %s278
          %s280 = sshll.u32 %s273, 4
          %s281 = int_to_ptr.vmem [resolvable:$true] %s280
          %286 = dma.hbm_to_vmem [thread:$0]  %s279, 1024, %s281, %s270, 128, 128, 8
        $region44: #{tpu_custom_call.1} parent=39 // pred_fallthru
          _
      $region40: #{tpu_custom_call.1} parent=5 // pred_fallthru
        _
      %p287 = scmp.le.s32.totalorder 1, %s21
      %p288 = scmp.lt.s32.totalorder %s21, 3
      %p289 = pnand %p287, %p288
      %p290 = pneg %p289
      // Predicated region
      $region45: #{tpu_custom_call.1} parent=5 // pred_check
        _
      $region46: #{tpu_custom_call.1} parent=5 // pred_check_branch
        %292 = sbr.rel (%p289) target = $region48
      $region47: #{tpu_custom_call.1} parent=5 // pred_region
        %s293 = ssub.s32 %s21, 1
        %s294 = sand.u32 %s34, 1
        %s295 = scalar_lea.sflag [#allocation3], %s294
        %s296 = sand.u32 %s34, 1
        %s297 = smul.addr %s296, 64
        %s298 = scalar_lea.vmem [#allocation2], %s297
        // Predicated region
        $region49: #{tpu_custom_call.1} parent=47 // pred_check
          %p299 = pneg %p47
        $region50: #{tpu_custom_call.1} parent=47 // pred_check_branch
          %301 = sbr.rel (%p299) target = $region52
        $region51: #{tpu_custom_call.1} parent=47 // pred_region
          %302 = dma.done %s295, 1024
        $region52: #{tpu_custom_call.1} parent=47 // pred_fallthru
          _
        // Predicated region
        $region53: #{tpu_custom_call.1} parent=47 // pred_check
          %p303 = pneg %p68
        $region54: #{tpu_custom_call.1} parent=47 // pred_check_branch
          %305 = sbr.rel (%p303) target = $region56
        $region55: #{tpu_custom_call.1} parent=47 // pred_region
          %306 = dma.done [#allocation6], 2048
        $region56: #{tpu_custom_call.1} parent=47 // pred_fallthru
          _
        // Predicated region
        $region57: #{tpu_custom_call.1} parent=47 // pred_check
          %p307 = pneg %p110
        $region58: #{tpu_custom_call.1} parent=47 // pred_check_branch
          %309 = sbr.rel (%p307) target = $region60
        $region59: #{tpu_custom_call.1} parent=47 // pred_region
          %310 = dma.done [#allocation6], 2048
        $region60: #{tpu_custom_call.1} parent=47 // pred_fallthru
          _
        // Predicated region
        $region61: #{tpu_custom_call.1} parent=47 // pred_check
          %p311 = pneg %p152
        $region62: #{tpu_custom_call.1} parent=47 // pred_check_branch
          %313 = sbr.rel (%p311) target = $region64
        $region63: #{tpu_custom_call.1} parent=47 // pred_region
          %314 = dma.done [#allocation9], 2048
        $region64: #{tpu_custom_call.1} parent=47 // pred_fallthru
          _
        %s315 = sand.u32 %s34, 1
        %s316 = scalar_lea.sflag [#allocation3], %s315
        %s317 = sand.u32 %s34, 1
        %s318 = smul.addr %s317, 64
        %s319 = scalar_lea.vmem [#allocation2], %s318
        %p320 = pneg %p47
        %p321 = pneg %p44
        %p322 = pneg %p68
        %p323 = pneg %p65
        %p324 = pneg %p89
        %p325 = pneg %p86
        %p326 = pneg %p110
        %p327 = pneg %p107
        %p328 = pneg %p131
        %p329 = pneg %p128
        %p330 = pneg %p152
        %p331 = pneg %p149
        %p332 = pneg %p173
        %p333 = pneg %p170
        %p334 = pneg %p199
        %p335 = pneg %p196
        %s336 = sand.u32 %s186, 1
        %s337 = scalar_lea.sflag [#allocation4], %s336
        %s338 = sand.u32 %s186, 1
        %s339 = smul.addr %s338, 64
        %s340 = scalar_lea.vmem [#allocation10], %s339
        %s341 = smul.u32 8, %s26
        %s342 = smul.u32 8, %s26
        %v343 = vld [vmem:[%s298] sm:$0xff]
        %v344 = vld [vmem:[%s298 + $0x8] sm:$0xff]
        %v345 = vld [vmem:[%s298 + $0x10] sm:$0xff]
        %v346 = vld [vmem:[%s298 + $0x18] sm:$0xff]
        %v347 = vld [vmem:[%s298 + $0x20] sm:$0xff]
        %v348 = vld [vmem:[%s298 + $0x28] sm:$0xff]
        %v349 = vld [vmem:[%s298 + $0x30] sm:$0xff]
        %v350 = vld [vmem:[%s298 + $0x38] sm:$0xff]
        %v351 = vld [vmem:[#allocation5] sm:$0xff]
        %v352 = vld [vmem:[#allocation5 + $0x8] sm:$0xff]
        %v353 = vld [vmem:[#allocation5 + $0x10] sm:$0xff]
        %v354 = vld [vmem:[#allocation5 + $0x18] sm:$0xff]
        %v355 = vld [vmem:[#allocation5 + $0x20] sm:$0xff]
        %v356 = vld [vmem:[#allocation5 + $0x28] sm:$0xff]
        %v357 = vld [vmem:[#allocation5 + $0x30] sm:$0xff]
        %v358 = vld [vmem:[#allocation5 + $0x38] sm:$0xff]
        %v359 = vld [vmem:[#allocation5 + $0x40] sm:$0xff]
        %v360 = vld [vmem:[#allocation5 + $0x48] sm:$0xff]
        %v361 = vld [vmem:[#allocation5 + $0x50] sm:$0xff]
        %v362 = vld [vmem:[#allocation5 + $0x58] sm:$0xff]
        %v363 = vld [vmem:[#allocation5 + $0x60] sm:$0xff]
        %v364 = vld [vmem:[#allocation5 + $0x68] sm:$0xff]
        %v365 = vld [vmem:[#allocation5 + $0x70] sm:$0xff]
        %v366 = vld [vmem:[#allocation5 + $0x78] sm:$0xff]
        %v367 = vld [vmem:[%s2] sm:$0x1]
        %v369 = vlaneseq
        %v370 = vshrl.u32 %v369, 7
        %v371 = vsub.s32 0, %v370
        %v372 = vrot.slane %v367, %v371
        %374 = vmatprep.subr.mxu0 0.0
        %375 = vmatpush1.msra.mxu0 %v351
        %376 = vmatprep.subr.mxu0 0.0
        %377 = vmatpush1.msra.mxu0 %v352
        %378 = vmatprep.subr.mxu0 0.0
        %379 = vmatpush1.msra.mxu0 %v353
        %380 = vmatprep.subr.mxu0 0.0
        %381 = vmatpush1.msra.mxu0 %v354
        %382 = vmatprep.subr.mxu0 0.0
        %383 = vmatpush1.msra.mxu0 %v355
        %384 = vmatprep.subr.mxu0 0.0
        %385 = vmatpush1.msra.mxu0 %v356
        %386 = vmatprep.subr.mxu0 0.0
        %387 = vmatpush1.msra.mxu0 %v357
        %388 = vmatprep.subr.mxu0 0.0
        %389 = vmatpush1.msra.mxu0 %v358
        %390 = vmatprep.subr.mxu0 0.0
        %391 = vmatpush1.msra.mxu0 %v359
        %392 = vmatprep.subr.mxu0 0.0
        %393 = vmatpush1.msra.mxu0 %v360
        %394 = vmatprep.subr.mxu0 0.0
        %395 = vmatpush1.msra.mxu0 %v361
        %396 = vmatprep.subr.mxu0 0.0
        %397 = vmatpush1.msra.mxu0 %v362
        %398 = vmatprep.subr.mxu0 0.0
        %399 = vmatpush1.msra.mxu0 %v363
        %400 = vmatprep.subr.mxu0 0.0
        %401 = vmatpush1.msra.mxu0 %v364
        %402 = vmatprep.subr.mxu0 0.0
        %403 = vmatpush1.msra.mxu0 %v365
        %404 = vmatprep.subr.mxu0 0.0
        %405 = vmatpush1.msra.mxu0 %v366
        %406 = vmatprep.subr.mxu0 0.0
        %407 = vmatpush1.msra.mxu0 0.0
        %408 = vmatprep.subr.mxu0 0.0
        %409 = vmatpush1.msra.mxu0 0.0
        %410 = vmatprep.subr.mxu0 0.0
        %411 = vmatpush1.msra.mxu0 0.0
        %412 = vmatprep.subr.mxu0 0.0
        %413 = vmatpush1.msra.mxu0 0.0
        %414 = vmatprep.subr.mxu0 0.0
        %415 = vmatpush1.msra.mxu0 0.0
        %416 = vmatprep.subr.mxu0 0.0
        %417 = vmatpush1.msra.mxu0 0.0
        %418 = vmatprep.subr.mxu0 0.0
        %419 = vmatpush1.msra.mxu0 0.0
        %420 = vmatprep.subr.mxu0 0.0
        %421 = vmatpush1.msra.mxu0 0.0
        %422 = vmatprep.subr.mxu0 0.0
        %423 = vmatpush1.msra.mxu0 0.0
        %424 = vmatprep.subr.mxu0 0.0
        %425 = vmatpush1.msra.mxu0 0.0
        %426 = vmatprep.subr.mxu0 0.0
        %427 = vmatpush1.msra.mxu0 0.0
        %428 = vmatprep.subr.mxu0 0.0
        %429 = vmatpush1.msra.mxu0 0.0
        %430 = vmatprep.subr.mxu0 0.0
        %431 = vmatpush1.msra.mxu0 0.0
        %432 = vmatprep.subr.mxu0 0.0
        %433 = vmatpush1.msra.mxu0 0.0
        %434 = vmatprep.subr.mxu0 0.0
        %435 = vmatpush1.msra.mxu0 0.0
        %436 = vmatprep.subr.mxu0 0.0
        %437 = vmatpush1.msra.mxu0 0.0
        %438 = vmatprep.mubr.f32.mxu0 0.0
        %439 = vmatmul.mubr.f32.gmra.mrb[0].mxu0 %v343
        %v440 = vpop.f32.mrb[0].mxu0
        %v441 = vadd.f32 %v372, %v440
        %v442 = vpop.f32.mrb[0].mxu0
        %443 = vmatprep.mubr.f32.mxu0 0.0
        %444 = vmatmul.mubr.f32.gmra.mrb[0].mxu0 %v344
        %v445 = vpop.f32.mrb[0].mxu0
        %v446 = vadd.f32 %v372, %v445
        %v447 = vpop.f32.mrb[0].mxu0
        %448 = vmatprep.mubr.f32.mxu0 0.0
        %449 = vmatmul.mubr.f32.gmra.mrb[0].mxu0 %v345
        %v450 = vpop.f32.mrb[0].mxu0
        %v451 = vadd.f32 %v372, %v450
        %v452 = vpop.f32.mrb[0].mxu0
        %453 = vmatprep.mubr.f32.mxu0 0.0
        %454 = vmatmul.mubr.f32.gmra.mrb[0].mxu0 %v346
        %v455 = vpop.f32.mrb[0].mxu0
        %v456 = vadd.f32 %v372, %v455
        %v457 = vpop.f32.mrb[0].mxu0
        %458 = vmatprep.mubr.f32.mxu0 0.0
        %459 = vmatmul.mubr.f32.gmra.mrb[0].mxu0 %v347
        %v460 = vpop.f32.mrb[0].mxu0
        %v461 = vadd.f32 %v372, %v460
        %v462 = vpop.f32.mrb[0].mxu0
        %463 = vmatprep.mubr.f32.mxu0 0.0
        %464 = vmatmul.mubr.f32.gmra.mrb[0].mxu0 %v348
        %v465 = vpop.f32.mrb[0].mxu0
        %v466 = vadd.f32 %v372, %v465
        %v467 = vpop.f32.mrb[0].mxu0
        %468 = vmatprep.mubr.f32.mxu0 0.0
        %469 = vmatmul.mubr.f32.gmra.mrb[0].mxu0 %v349
        %v470 = vpop.f32.mrb[0].mxu0
        %v471 = vadd.f32 %v372, %v470
        %v472 = vpop.f32.mrb[0].mxu0
        %473 = vmatprep.mubr.f32.mxu0 0.0
        %474 = vmatmul.mubr.f32.gmra.mrb[0].mxu0 %v350
        %v475 = vpop.f32.mrb[0].mxu0
        %v476 = vadd.f32 %v372, %v475
        %v477 = vpop.f32.mrb[0].mxu0
        %478 = vdwg.mxu0
        %v479 = vxor.u32 %v441, 2147483648
        %v480 = vxor.u32 %v446, 2147483648
        %v481 = vxor.u32 %v451, 2147483648
        %v482 = vxor.u32 %v456, 2147483648
        %v483 = vxor.u32 %v461, 2147483648
        %v484 = vxor.u32 %v466, 2147483648
        %v485 = vxor.u32 %v471, 2147483648
        %v486 = vxor.u32 %v476, 2147483648
        %v487 = vmul.f32 %v479, 1.442695
        %v488 = vpow.pop %v487
        %v489 = vmul.f32 %v480, 1.442695
        %v490 = vpow.pop %v489
        %v491 = vmul.f32 %v481, 1.442695
        %v492 = vpow.pop %v491
        %v493 = vmul.f32 %v482, 1.442695
        %v494 = vpow.pop %v493
        %v495 = vmul.f32 %v483, 1.442695
        %v496 = vpow.pop %v495
        %v497 = vmul.f32 %v484, 1.442695
        %v498 = vpow.pop %v497
        %v499 = vmul.f32 %v485, 1.442695
        %v500 = vpow.pop %v499
        %v501 = vmul.f32 %v486, 1.442695
        %v502 = vpow.pop %v501
        %v503 = vadd.f32 %v488, 1.0
        %v504 = vadd.f32 %v490, 1.0
        %v505 = vadd.f32 %v492, 1.0
        %v506 = vadd.f32 %v494, 1.0
        %v507 = vadd.f32 %v496, 1.0
        %v508 = vadd.f32 %v498, 1.0
        %v509 = vadd.f32 %v500, 1.0
        %v510 = vadd.f32 %v502, 1.0
        %v511 = vrcp.pop %v503
        %v512 = vmul.f32 1.0, %v511
        %v513 = vrcp.pop %v504
        %v514 = vmul.f32 1.0, %v513
        %v515 = vrcp.pop %v505
        %v516 = vmul.f32 1.0, %v515
        %v517 = vrcp.pop %v506
        %v518 = vmul.f32 1.0, %v517
        %v519 = vrcp.pop %v507
        %v520 = vmul.f32 1.0, %v519
        %v521 = vrcp.pop %v508
        %v522 = vmul.f32 1.0, %v521
        %v523 = vrcp.pop %v509
        %v524 = vmul.f32 1.0, %v523
        %v525 = vrcp.pop %v510
        %v526 = vmul.f32 1.0, %v525
        %v527 = vld [vmem:[#allocation7] sm:$0xff]
        %v528 = vld [vmem:[#allocation7 + $0x8] sm:$0xff]
        %v529 = vld [vmem:[#allocation7 + $0x10] sm:$0xff]
        %v530 = vld [vmem:[#allocation7 + $0x18] sm:$0xff]
        %v531 = vld [vmem:[#allocation7 + $0x20] sm:$0xff]
        %v532 = vld [vmem:[#allocation7 + $0x28] sm:$0xff]
        %v533 = vld [vmem:[#allocation7 + $0x30] sm:$0xff]
        %v534 = vld [vmem:[#allocation7 + $0x38] sm:$0xff]
        %v535 = vld [vmem:[#allocation7 + $0x40] sm:$0xff]
        %v536 = vld [vmem:[#allocation7 + $0x48] sm:$0xff]
        %v537 = vld [vmem:[#allocation7 + $0x50] sm:$0xff]
        %v538 = vld [vmem:[#allocation7 + $0x58] sm:$0xff]
        %v539 = vld [vmem:[#allocation7 + $0x60] sm:$0xff]
        %v540 = vld [vmem:[#allocation7 + $0x68] sm:$0xff]
        %v541 = vld [vmem:[#allocation7 + $0x70] sm:$0xff]
        %v542 = vld [vmem:[#allocation7 + $0x78] sm:$0xff]
        %v543 = vld [vmem:[%s4] sm:$0x1]
        %v545 = vlaneseq
        %v546 = vshrl.u32 %v545, 7
        %v547 = vsub.s32 0, %v546
        %v548 = vrot.slane %v543, %v547
        %550 = vmatprep.subr.mxu0 0.0
        %551 = vmatpush1.msra.mxu0 %v527
        %552 = vmatprep.subr.mxu0 0.0
        %553 = vmatpush1.msra.mxu0 %v528
        %554 = vmatprep.subr.mxu0 0.0
        %555 = vmatpush1.msra.mxu0 %v529
        %556 = vmatprep.subr.mxu0 0.0
        %557 = vmatpush1.msra.mxu0 %v530
        %558 = vmatprep.subr.mxu0 0.0
        %559 = vmatpush1.msra.mxu0 %v531
        %560 = vmatprep.subr.mxu0 0.0
        %561 = vmatpush1.msra.mxu0 %v532
        %562 = vmatprep.subr.mxu0 0.0
        %563 = vmatpush1.msra.mxu0 %v533
        %564 = vmatprep.subr.mxu0 0.0
        %565 = vmatpush1.msra.mxu0 %v534
        %566 = vmatprep.subr.mxu0 0.0
        %567 = vmatpush1.msra.mxu0 %v535
        %568 = vmatprep.subr.mxu0 0.0
        %569 = vmatpush1.msra.mxu0 %v536
        %570 = vmatprep.subr.mxu0 0.0
        %571 = vmatpush1.msra.mxu0 %v537
        %572 = vmatprep.subr.mxu0 0.0
        %573 = vmatpush1.msra.mxu0 %v538
        %574 = vmatprep.subr.mxu0 0.0
        %575 = vmatpush1.msra.mxu0 %v539
        %576 = vmatprep.subr.mxu0 0.0
        %577 = vmatpush1.msra.mxu0 %v540
        %578 = vmatprep.subr.mxu0 0.0
        %579 = vmatpush1.msra.mxu0 %v541
        %580 = vmatprep.subr.mxu0 0.0
        %581 = vmatpush1.msra.mxu0 %v542
        %582 = vmatprep.subr.mxu0 0.0
        %583 = vmatpush1.msra.mxu0 0.0
        %584 = vmatprep.subr.mxu0 0.0
        %585 = vmatpush1.msra.mxu0 0.0
        %586 = vmatprep.subr.mxu0 0.0
        %587 = vmatpush1.msra.mxu0 0.0
        %588 = vmatprep.subr.mxu0 0.0
        %589 = vmatpush1.msra.mxu0 0.0
        %590 = vmatprep.subr.mxu0 0.0
        %591 = vmatpush1.msra.mxu0 0.0
        %592 = vmatprep.subr.mxu0 0.0
        %593 = vmatpush1.msra.mxu0 0.0
        %594 = vmatprep.subr.mxu0 0.0
        %595 = vmatpush1.msra.mxu0 0.0
        %596 = vmatprep.subr.mxu0 0.0
        %597 = vmatpush1.msra.mxu0 0.0
        %598 = vmatprep.subr.mxu0 0.0
        %599 = vmatpush1.msra.mxu0 0.0
        %600 = vmatprep.subr.mxu0 0.0
        %601 = vmatpush1.msra.mxu0 0.0
        %602 = vmatprep.subr.mxu0 0.0
        %603 = vmatpush1.msra.mxu0 0.0
        %604 = vmatprep.subr.mxu0 0.0
        %605 = vmatpush1.msra.mxu0 0.0
        %606 = vmatprep.subr.mxu0 0.0
        %607 = vmatpush1.msra.mxu0 0.0
        %608 = vmatprep.subr.mxu0 0.0
        %609 = vmatpush1.msra.mxu0 0.0
        %610 = vmatprep.subr.mxu0 0.0
        %611 = vmatpush1.msra.mxu0 0.0
        %612 = vmatprep.subr.mxu0 0.0
        %613 = vmatpush1.msra.mxu0 0.0
        %614 = vmatprep.mubr.f32.mxu0 0.0
        %615 = vmatmul.mubr.f32.gmra.mrb[0].mxu0 %v512
        %v616 = vpop.f32.mrb[0].mxu0
        %v617 = vadd.f32 %v548, %v616
        %v618 = vpop.f32.mrb[0].mxu0
        %619 = vmatprep.mubr.f32.mxu0 0.0
        %620 = vmatmul.mubr.f32.gmra.mrb[0].mxu0 %v514
        %v621 = vpop.f32.mrb[0].mxu0
        %v622 = vadd.f32 %v548, %v621
        %v623 = vpop.f32.mrb[0].mxu0
        %624 = vmatprep.mubr.f32.mxu0 0.0
        %625 = vmatmul.mubr.f32.gmra.mrb[0].mxu0 %v516
        %v626 = vpop.f32.mrb[0].mxu0
        %v627 = vadd.f32 %v548, %v626
        %v628 = vpop.f32.mrb[0].mxu0
        %629 = vmatprep.mubr.f32.mxu0 0.0
        %630 = vmatmul.mubr.f32.gmra.mrb[0].mxu0 %v518
        %v631 = vpop.f32.mrb[0].mxu0
        %v632 = vadd.f32 %v548, %v631
        %v633 = vpop.f32.mrb[0].mxu0
        %634 = vmatprep.mubr.f32.mxu0 0.0
        %635 = vmatmul.mubr.f32.gmra.mrb[0].mxu0 %v520
        %v636 = vpop.f32.mrb[0].mxu0
        %v637 = vadd.f32 %v548, %v636
        %v638 = vpop.f32.mrb[0].mxu0
        %639 = vmatprep.mubr.f32.mxu0 0.0
        %640 = vmatmul.mubr.f32.gmra.mrb[0].mxu0 %v522
        %v641 = vpop.f32.mrb[0].mxu0
        %v642 = vadd.f32 %v548, %v641
        %v643 = vpop.f32.mrb[0].mxu0
        %644 = vmatprep.mubr.f32.mxu0 0.0
        %645 = vmatmul.mubr.f32.gmra.mrb[0].mxu0 %v524
        %v646 = vpop.f32.mrb[0].mxu0
        %v647 = vadd.f32 %v548, %v646
        %v648 = vpop.f32.mrb[0].mxu0
        %649 = vmatprep.mubr.f32.mxu0 0.0
        %650 = vmatmul.mubr.f32.gmra.mrb[0].mxu0 %v526
        %v651 = vpop.f32.mrb[0].mxu0
        %v652 = vadd.f32 %v548, %v651
        %v653 = vpop.f32.mrb[0].mxu0
        %654 = vdwg.mxu0
        %v655 = vxor.u32 %v617, 2147483648
        %v656 = vxor.u32 %v622, 2147483648
        %v657 = vxor.u32 %v627, 2147483648
        %v658 = vxor.u32 %v632, 2147483648
        %v659 = vxor.u32 %v637, 2147483648
        %v660 = vxor.u32 %v642, 2147483648
        %v661 = vxor.u32 %v647, 2147483648
        %v662 = vxor.u32 %v652, 2147483648
        %v663 = vmul.f32 %v655, 1.442695
        %v664 = vpow.pop %v663
        %v665 = vmul.f32 %v656, 1.442695
        %v666 = vpow.pop %v665
        %v667 = vmul.f32 %v657, 1.442695
        %v668 = vpow.pop %v667
        %v669 = vmul.f32 %v658, 1.442695
        %v670 = vpow.pop %v669
        %v671 = vmul.f32 %v659, 1.442695
        %v672 = vpow.pop %v671
        %v673 = vmul.f32 %v660, 1.442695
        %v674 = vpow.pop %v673
        %v675 = vmul.f32 %v661, 1.442695
        %v676 = vpow.pop %v675
        %v677 = vmul.f32 %v662, 1.442695
        %v678 = vpow.pop %v677
        %v679 = vadd.f32 %v664, 1.0
        %v680 = vadd.f32 %v666, 1.0
        %v681 = vadd.f32 %v668, 1.0
        %v682 = vadd.f32 %v670, 1.0
        %v683 = vadd.f32 %v672, 1.0
        %v684 = vadd.f32 %v674, 1.0
        %v685 = vadd.f32 %v676, 1.0
        %v686 = vadd.f32 %v678, 1.0
        %v687 = vrcp.pop %v679
        %v688 = vmul.f32 1.0, %v687
        %v689 = vrcp.pop %v680
        %v690 = vmul.f32 1.0, %v689
        %v691 = vrcp.pop %v681
        %v692 = vmul.f32 1.0, %v691
        %v693 = vrcp.pop %v682
        %v694 = vmul.f32 1.0, %v693
        %v695 = vrcp.pop %v683
        %v696 = vmul.f32 1.0, %v695
        %v697 = vrcp.pop %v684
        %v698 = vmul.f32 1.0, %v697
        %v699 = vrcp.pop %v685
        %v700 = vmul.f32 1.0, %v699
        %v701 = vrcp.pop %v686
        %v702 = vmul.f32 1.0, %v701
        %v703 = vld [vmem:[#allocation8] sm:$0xff]
        %v704 = vld [vmem:[#allocation8 + $0x8] sm:$0xff]
        %v705 = vld [vmem:[#allocation8 + $0x10] sm:$0xff]
        %v706 = vld [vmem:[#allocation8 + $0x18] sm:$0xff]
        %v707 = vld [vmem:[#allocation8 + $0x20] sm:$0xff]
        %v708 = vld [vmem:[#allocation8 + $0x28] sm:$0xff]
        %v709 = vld [vmem:[#allocation8 + $0x30] sm:$0xff]
        %v710 = vld [vmem:[#allocation8 + $0x38] sm:$0xff]
        %v711 = vld [vmem:[#allocation8 + $0x40] sm:$0xff]
        %v712 = vld [vmem:[#allocation8 + $0x48] sm:$0xff]
        %v713 = vld [vmem:[#allocation8 + $0x50] sm:$0xff]
        %v714 = vld [vmem:[#allocation8 + $0x58] sm:$0xff]
        %v715 = vld [vmem:[#allocation8 + $0x60] sm:$0xff]
        %v716 = vld [vmem:[#allocation8 + $0x68] sm:$0xff]
        %v717 = vld [vmem:[#allocation8 + $0x70] sm:$0xff]
        %v718 = vld [vmem:[#allocation8 + $0x78] sm:$0xff]
        %v719 = vld [vmem:[%s6] sm:$0x1]
        %v721 = vlaneseq
        %v722 = vshrl.u32 %v721, 7
        %v723 = vsub.s32 0, %v722
        %v724 = vrot.slane %v719, %v723
        %726 = vmatprep.subr.mxu0 0.0
        %727 = vmatpush1.msra.mxu0 %v703
        %728 = vmatprep.subr.mxu0 0.0
        %729 = vmatpush1.msra.mxu0 %v704
        %730 = vmatprep.subr.mxu0 0.0
        %731 = vmatpush1.msra.mxu0 %v705
        %732 = vmatprep.subr.mxu0 0.0
        %733 = vmatpush1.msra.mxu0 %v706
        %734 = vmatprep.subr.mxu0 0.0
        %735 = vmatpush1.msra.mxu0 %v707
        %736 = vmatprep.subr.mxu0 0.0
        %737 = vmatpush1.msra.mxu0 %v708
        %738 = vmatprep.subr.mxu0 0.0
        %739 = vmatpush1.msra.mxu0 %v709
        %740 = vmatprep.subr.mxu0 0.0
        %741 = vmatpush1.msra.mxu0 %v710
        %742 = vmatprep.subr.mxu0 0.0
        %743 = vmatpush1.msra.mxu0 %v711
        %744 = vmatprep.subr.mxu0 0.0
        %745 = vmatpush1.msra.mxu0 %v712
        %746 = vmatprep.subr.mxu0 0.0
        %747 = vmatpush1.msra.mxu0 %v713
        %748 = vmatprep.subr.mxu0 0.0
        %749 = vmatpush1.msra.mxu0 %v714
        %750 = vmatprep.subr.mxu0 0.0
        %751 = vmatpush1.msra.mxu0 %v715
        %752 = vmatprep.subr.mxu0 0.0
        %753 = vmatpush1.msra.mxu0 %v716
        %754 = vmatprep.subr.mxu0 0.0
        %755 = vmatpush1.msra.mxu0 %v717
        %756 = vmatprep.subr.mxu0 0.0
        %757 = vmatpush1.msra.mxu0 %v718
        %758 = vmatprep.subr.mxu0 0.0
        %759 = vmatpush1.msra.mxu0 0.0
        %760 = vmatprep.subr.mxu0 0.0
        %761 = vmatpush1.msra.mxu0 0.0
        %762 = vmatprep.subr.mxu0 0.0
        %763 = vmatpush1.msra.mxu0 0.0
        %764 = vmatprep.subr.mxu0 0.0
        %765 = vmatpush1.msra.mxu0 0.0
        %766 = vmatprep.subr.mxu0 0.0
        %767 = vmatpush1.msra.mxu0 0.0
        %768 = vmatprep.subr.mxu0 0.0
        %769 = vmatpush1.msra.mxu0 0.0
        %770 = vmatprep.subr.mxu0 0.0
        %771 = vmatpush1.msra.mxu0 0.0
        %772 = vmatprep.subr.mxu0 0.0
        %773 = vmatpush1.msra.mxu0 0.0
        %774 = vmatprep.subr.mxu0 0.0
        %775 = vmatpush1.msra.mxu0 0.0
        %776 = vmatprep.subr.mxu0 0.0
        %777 = vmatpush1.msra.mxu0 0.0
        %778 = vmatprep.subr.mxu0 0.0
        %779 = vmatpush1.msra.mxu0 0.0
        %780 = vmatprep.subr.mxu0 0.0
        %781 = vmatpush1.msra.mxu0 0.0
        %782 = vmatprep.subr.mxu0 0.0
        %783 = vmatpush1.msra.mxu0 0.0
        %784 = vmatprep.subr.mxu0 0.0
        %785 = vmatpush1.msra.mxu0 0.0
        %786 = vmatprep.subr.mxu0 0.0
        %787 = vmatpush1.msra.mxu0 0.0
        %788 = vmatprep.subr.mxu0 0.0
        %789 = vmatpush1.msra.mxu0 0.0
        %790 = vmatprep.mubr.f32.mxu0 0.0
        %791 = vmatmul.mubr.f32.gmra.mrb[0].mxu0 %v688
        %v792 = vpop.f32.mrb[0].mxu0
        %v793 = vadd.f32 %v724, %v792
        %v794 = vpop.f32.mrb[0].mxu0
        %795 = vmatprep.mubr.f32.mxu0 0.0
        %796 = vmatmul.mubr.f32.gmra.mrb[0].mxu0 %v690
        %v797 = vpop.f32.mrb[0].mxu0
        %v798 = vadd.f32 %v724, %v797
        %v799 = vpop.f32.mrb[0].mxu0
        %800 = vmatprep.mubr.f32.mxu0 0.0
        %801 = vmatmul.mubr.f32.gmra.mrb[0].mxu0 %v692
        %v802 = vpop.f32.mrb[0].mxu0
        %v803 = vadd.f32 %v724, %v802
        %v804 = vpop.f32.mrb[0].mxu0
        %805 = vmatprep.mubr.f32.mxu0 0.0
        %806 = vmatmul.mubr.f32.gmra.mrb[0].mxu0 %v694
        %v807 = vpop.f32.mrb[0].mxu0
        %v808 = vadd.f32 %v724, %v807
        %v809 = vpop.f32.mrb[0].mxu0
        %810 = vmatprep.mubr.f32.mxu0 0.0
        %811 = vmatmul.mubr.f32.gmra.mrb[0].mxu0 %v696
        %v812 = vpop.f32.mrb[0].mxu0
        %v813 = vadd.f32 %v724, %v812
        %v814 = vpop.f32.mrb[0].mxu0
        %815 = vmatprep.mubr.f32.mxu0 0.0
        %816 = vmatmul.mubr.f32.gmra.mrb[0].mxu0 %v698
        %v817 = vpop.f32.mrb[0].mxu0
        %v818 = vadd.f32 %v724, %v817
        %v819 = vpop.f32.mrb[0].mxu0
        %820 = vmatprep.mubr.f32.mxu0 0.0
        %821 = vmatmul.mubr.f32.gmra.mrb[0].mxu0 %v700
        %v822 = vpop.f32.mrb[0].mxu0
        %v823 = vadd.f32 %v724, %v822
        %v824 = vpop.f32.mrb[0].mxu0
        %825 = vmatprep.mubr.f32.mxu0 0.0
        %826 = vmatmul.mubr.f32.gmra.mrb[0].mxu0 %v702
        %v827 = vpop.f32.mrb[0].mxu0
        %v828 = vadd.f32 %v724, %v827
        %v829 = vpop.f32.mrb[0].mxu0
        %830 = vdwg.mxu0
        %831 = vst [vmem:[%s340] sm:$0xff] %v793
        %832 = vst [vmem:[%s340 + $0x8] sm:$0xff] %v798
        %833 = vst [vmem:[%s340 + $0x10] sm:$0xff] %v803
        %834 = vst [vmem:[%s340 + $0x18] sm:$0xff] %v808
        %835 = vst [vmem:[%s340 + $0x20] sm:$0xff] %v813
        %836 = vst [vmem:[%s340 + $0x28] sm:$0xff] %v818
        %837 = vst [vmem:[%s340 + $0x30] sm:$0xff] %v823
        %838 = vst [vmem:[%s340 + $0x38] sm:$0xff] %v828
        %s839 = sand.u32 %s186, 1
        %s840 = scalar_lea.sflag [#allocation4], %s839
        %s841 = sand.u32 %s186, 1
        %s842 = smul.addr %s841, 64
        %s843 = scalar_lea.vmem [#allocation10], %s842
        // Predicated region
        $region65: #{tpu_custom_call.1} parent=47 // pred_check
          %p844 = pneg %p196
        $region66: #{tpu_custom_call.1} parent=47 // pred_check_branch
          %846 = sbr.rel (%p844) target = $region68
        $region67: #{tpu_custom_call.1} parent=47 // pred_region
          %s847 = smul.u32 8, %s26
          %s849 = ssub.s32 1024, 1024
          %850 = vsyncadd %s840, %s849
          %s851 = smul.addr %s847, 128
          %s852 = scalar_lea.hbm %s7, %s851
          %s853 = sshll.u32 %s843, 4
          %s854 = int_to_ptr.vmem [resolvable:$true] %s853
          %859 = dma.vmem_to_hbm [thread:$0]  %s854, 1024, %s852, %s840, 128, 128, 8
        $region68: #{tpu_custom_call.1} parent=47 // pred_fallthru
          _
      $region48: #{tpu_custom_call.1} parent=5 // pred_fallthru
        _
      %p860 = scmp.le.s32.totalorder 2, %s21
      // Predicated region
      $region69: #{tpu_custom_call.1} parent=5 // pred_check
        %p861 = pneg %p860
      $region70: #{tpu_custom_call.1} parent=5 // pred_check_branch
        %863 = sbr.rel (%p861) target = $region72
      $region71: #{tpu_custom_call.1} parent=5 // pred_region
        %s864 = ssub.s32 %s21, 2
        // Predicated region
        $region73: #{tpu_custom_call.1} parent=71 // pred_check
          %p865 = pneg %p202
        $region74: #{tpu_custom_call.1} parent=71 // pred_check_branch
          %867 = sbr.rel (%p865) target = $region76
        $region75: #{tpu_custom_call.1} parent=71 // pred_region
          %s868 = sand.u32 %s187, 1
          %s869 = scalar_lea.sflag [#allocation4], %s868
          %s870 = sand.u32 %s187, 1
          %s871 = smul.addr %s870, 64
          %s872 = scalar_lea.vmem [#allocation10], %s871
          %873 = dma.done %s869, 1024
        $region76: #{tpu_custom_call.1} parent=71 // pred_fallthru
          _
      $region72: #{tpu_custom_call.1} parent=5 // pred_fallthru
        _
    $region6: #{tpu_custom_call.1} parent=1 // loop_footer
      %s25 = sadd.s32 1, %s21
    $region7: #{tpu_custom_call.1} parent=1 // loop_footer_branch
      %20 = sbr.rel target = $region3
    $region8: #{tpu_custom_call.1} parent=1 // loop_exit
      _
    %874 = vsyncpa [#allocation3], 1
    %s875 = scalar_lea.sflag [#allocation3], 1
    %876 = vsyncpa %s875, 1
    %877 = vsyncpa [#allocation6], 1
    %878 = vsyncpa [#allocation9], 1
    %879 = vsyncpa [#allocation4], 1
    %s880 = scalar_lea.sflag [#allocation4], 1
    %881 = vsyncpa %s880, 1

// kernel: tpu_custom_call.1
$region0: #{tpu_custom_call.1}
  #allocation0 [shape = 'u32[]', space=smem, size = 0x4, offset = 0x4, fixed_abs, tag = 'smem constant byte address 0x4 - core index']
  #allocation1 [shape = 'u32[144,128]{1,0:T(1,128)}', space=vmem, size = 0x12000, scoped, tag = 'internal scratch']
  %s0 = inlined_call_operand.hbm [shape: f32[128,128], index: 0, kind: input, shape index: {}]
  %s1 = inlined_call_operand.hbm [shape: f32[128,128], index: 1, kind: input, shape index: {}]
  %s2 = inlined_call_operand.vmem [shape: f32[1,128], index: 2, kind: input, shape index: {}]
  %s3 = inlined_call_operand.hbm [shape: f32[128,128], index: 3, kind: input, shape index: {}]
  %s4 = inlined_call_operand.vmem [shape: f32[1,128], index: 4, kind: input, shape index: {}]
  %s5 = inlined_call_operand.hbm [shape: f32[128,128], index: 5, kind: input, shape index: {}]
  %s6 = inlined_call_operand.vmem [shape: f32[1,128], index: 6, kind: input, shape index: {}]
  %s7 = inlined_call_operand.hbm [shape: f32[128,128], index: 7, kind: output, shape index: {}]
  %s8 = sld [smem:[#allocation0]]
  $region77: #{tpu_custom_call.1} parent=0
    _
  %s10 = ssub.s32 1, %s8
  %s11 = scalar_select 0, %s10, %s8
  $region1: #{tpu_custom_call.1} parent=0
    #allocation2 [shape = 'u8[65536]{0}', space=vmem, size = 0x10000, scoped, tag = 'input window, operand 0']
    #allocation3 [shape = 's32[2]{0}', space=sflag, size = 0x8, scoped, tag = 'scoped memory for tpu_custom_call.1']
    #allocation4 [shape = 's32[2]{0}', space=sflag, size = 0x8, scoped, tag = 'scoped memory for tpu_custom_call.1']
    #allocation5 [shape = 'u8[65536]{0}', space=vmem, size = 0x10000, scoped, tag = 'input window, operand 1, single buffered']
    #allocation6 [shape = 's32[1]{0}', space=sflag, size = 0x4, scoped, tag = 'scoped memory for tpu_custom_call.1']
    #allocation7 [shape = 'u8[65536]{0}', space=vmem, size = 0x10000, scoped, tag = 'input window, operand 3, single buffered']
    #allocation8 [shape = 'u8[65536]{0}', space=vmem, size = 0x10000, scoped, tag = 'input window, operand 5, single buffered']
    #allocation9 [shape = 's32[1]{0}', space=sflag, size = 0x4, scoped, tag = 'scoped memory for tpu_custom_call.1']
    #allocation10 [shape = 'u8[65536]{0}', space=vmem, size = 0x10000, scoped, tag = 'output window, operand 0']
    %12 = vsyncpa [#allocation3], 0
    %s13 = scalar_lea.sflag [#allocation3], 1
    %14 = vsyncpa %s13, 0
    %15 = vsyncpa [#allocation6], 0
    %16 = vsyncpa [#allocation9], 0
    %17 = vsyncpa [#allocation4], 0
    %s18 = scalar_lea.sflag [#allocation4], 1
    %19 = vsyncpa %s18, 0
    loop: start=0, step=1, limit=4
    $region2: #{tpu_custom_call.1} parent=1 // loop_pre_header
      _
    $region3: #{tpu_custom_call.1} parent=1 // loop_header
      %s21 = sphi 0, %s25
      %p22 = scmp.ge.s32.totalorder %s21, 4
      %s31 = sphi 0, %s33
      %s34 = sphi 0, %s31
      %s35 = sphi 0, %s34
      %s51 = sphi 0, %s35
      %s55 = sphi 0, %s55
      %s57 = sphi 0, %s55
      %s58 = sphi 0, %s57
      %s72 = sphi 0, %s58
      %s76 = sphi 0, %s76
      %s78 = sphi 0, %s76
      %s79 = sphi 0, %s78
      %s93 = sphi 0, %s79
      %s97 = sphi 0, %s97
      %s99 = sphi 0, %s97
      %s100 = sphi 0, %s99
      %s114 = sphi 0, %s100
      %s118 = sphi 0, %s118
      %s120 = sphi 0, %s118
      %s121 = sphi 0, %s120
      %s135 = sphi 0, %s121
      %s139 = sphi 0, %s139
      %s141 = sphi 0, %s139
      %s142 = sphi 0, %s141
      %s156 = sphi 0, %s142
      %s160 = sphi 0, %s160
      %s162 = sphi 0, %s160
      %s163 = sphi 0, %s162
      %s177 = sphi 0, %s163
      %s183 = sphi 0, %s185
      %s186 = sphi 0, %s183
      %s187 = sphi 0, %s186
      %s203 = sphi 0, %s187
    $region4: #{tpu_custom_call.1} parent=1 // loop_header_branch
      %24 = sbr.rel (%p22) target = $region8
    $region5: #{tpu_custom_call.1} parent=1 // loop_body
      %s26 = ssub.s32 %s21, 1
      %s27 = ssub.s32 %s21, 2
      %s28 = sadd.s32 %s21, 1
      %s29 = ssub.s32 %s21, %s28
      %p30 = scmp.eq.s32.totalorder %s29, 0
      %s32 = sadd.s32 %s31, 1
      %s33 = scalar_select %p30, %s31, %s32
      %p36 = pneg %p30
      %p37 = scmp.eq.s32.totalorder %s21, 1
      %p38 = por %p36, %p37
      %p39 = scmp.ne.s32.totalorder %s31, %s34
      %p40 = scmp.eq.s32.totalorder %s21, 0
      %p41 = por %p39, %p40
      %p42 = scmp.ne.s32.totalorder %s31, %s34
      %p43 = scmp.eq.s32.totalorder %s26, 1
      %p44 = por %p42, %p43
      %p45 = scmp.ne.s32.totalorder %s34, %s35
      %p46 = scmp.eq.s32.totalorder %s26, 0
      %p47 = por %p45, %p46
      %p48 = scmp.ne.s32.totalorder %s34, %s35
      %p49 = scmp.eq.s32.totalorder %s27, 1
      %p50 = por %p48, %p49
      %p52 = scmp.ne.s32.totalorder %s35, %s51
      %p53 = scmp.eq.s32.totalorder %s27, 0
      %p54 = por %p52, %p53
      %s56 = sadd.s32 %s55, 1
      %p59 = scmp.eq.s32.totalorder %s21, 1
      %p60 = scmp.ne.s32.totalorder %s55, %s57
      %p61 = scmp.eq.s32.totalorder %s21, 0
      %p62 = por %p60, %p61
      %p63 = scmp.ne.s32.totalorder %s55, %s57
      %p64 = scmp.eq.s32.totalorder %s26, 1
      %p65 = por %p63, %p64
      %p66 = scmp.ne.s32.totalorder %s57, %s58
      %p67 = scmp.eq.s32.totalorder %s26, 0
      %p68 = por %p66, %p67
      %p69 = scmp.ne.s32.totalorder %s57, %s58
      %p70 = scmp.eq.s32.totalorder %s27, 1
      %p71 = por %p69, %p70
      %p73 = scmp.ne.s32.totalorder %s58, %s72
      %p74 = scmp.eq.s32.totalorder %s27, 0
      %p75 = por %p73, %p74
      %s77 = sadd.s32 %s76, 1
      %p80 = scmp.eq.s32.totalorder %s21, 1
      %p81 = scmp.ne.s32.totalorder %s76, %s78
      %p82 = scmp.eq.s32.totalorder %s21, 0
      %p83 = por %p81, %p82
      %p84 = scmp.ne.s32.totalorder %s76, %s78
      %p85 = scmp.eq.s32.totalorder %s26, 1
      %p86 = por %p84, %p85
      %p87 = scmp.ne.s32.totalorder %s78, %s79
      %p88 = scmp.eq.s32.totalorder %s26, 0
      %p89 = por %p87, %p88
      %p90 = scmp.ne.s32.totalorder %s78, %s79
      %p91 = scmp.eq.s32.totalorder %s27, 1
      %p92 = por %p90, %p91
      %p94 = scmp.ne.s32.totalorder %s79, %s93
      %p95 = scmp.eq.s32.totalorder %s27, 0
      %p96 = por %p94, %p95
      %s98 = sadd.s32 %s97, 1
      %p101 = scmp.eq.s32.totalorder %s21, 1
      %p102 = scmp.ne.s32.totalorder %s97, %s99
      %p103 = scmp.eq.s32.totalorder %s21, 0
      %p104 = por %p102, %p103
      %p105 = scmp.ne.s32.totalorder %s97, %s99
      %p106 = scmp.eq.s32.totalorder %s26, 1
      %p107 = por %p105, %p106
      %p108 = scmp.ne.s32.totalorder %s99, %s100
      %p109 = scmp.eq.s32.totalorder %s26, 0
      %p110 = por %p108, %p109
      %p111 = scmp.ne.s32.totalorder %s99, %s100
      %p112 = scmp.eq.s32.totalorder %s27, 1
      %p113 = por %p111, %p112
      %p115 = scmp.ne.s32.totalorder %s100, %s114
      %p116 = scmp.eq.s32.totalorder %s27, 0
      %p117 = por %p115, %p116
      %s119 = sadd.s32 %s118, 1
      %p122 = scmp.eq.s32.totalorder %s21, 1
      %p123 = scmp.ne.s32.totalorder %s118, %s120
      %p124 = scmp.eq.s32.totalorder %s21, 0
      %p125 = por %p123, %p124
      %p126 = scmp.ne.s32.totalorder %s118, %s120
      %p127 = scmp.eq.s32.totalorder %s26, 1
      %p128 = por %p126, %p127
      %p129 = scmp.ne.s32.totalorder %s120, %s121
      %p130 = scmp.eq.s32.totalorder %s26, 0
      %p131 = por %p129, %p130
      %p132 = scmp.ne.s32.totalorder %s120, %s121
      %p133 = scmp.eq.s32.totalorder %s27, 1
      %p134 = por %p132, %p133
      %p136 = scmp.ne.s32.totalorder %s121, %s135
      %p137 = scmp.eq.s32.totalorder %s27, 0
      %p138 = por %p136, %p137
      %s140 = sadd.s32 %s139, 1
      %p143 = scmp.eq.s32.totalorder %s21, 1
      %p144 = scmp.ne.s32.totalorder %s139, %s141
      %p145 = scmp.eq.s32.totalorder %s21, 0
      %p146 = por %p144, %p145
      %p147 = scmp.ne.s32.totalorder %s139, %s141
      %p148 = scmp.eq.s32.totalorder %s26, 1
      %p149 = por %p147, %p148
      %p150 = scmp.ne.s32.totalorder %s141, %s142
      %p151 = scmp.eq.s32.totalorder %s26, 0
      %p152 = por %p150, %p151
      %p153 = scmp.ne.s32.totalorder %s141, %s142
      %p154 = scmp.eq.s32.totalorder %s27, 1
      %p155 = por %p153, %p154
      %p157 = scmp.ne.s32.totalorder %s142, %s156
      %p158 = scmp.eq.s32.totalorder %s27, 0
      %p159 = por %p157, %p158
      %s161 = sadd.s32 %s160, 1
      %p164 = scmp.eq.s32.totalorder %s21, 1
      %p165 = scmp.ne.s32.totalorder %s160, %s162
      %p166 = scmp.eq.s32.totalorder %s21, 0
      %p167 = por %p165, %p166
      %p168 = scmp.ne.s32.totalorder %s160, %s162
      %p169 = scmp.eq.s32.totalorder %s26, 1
      %p170 = por %p168, %p169
      %p171 = scmp.ne.s32.totalorder %s162, %s163
      %p172 = scmp.eq.s32.totalorder %s26, 0
      %p173 = por %p171, %p172
      %p174 = scmp.ne.s32.totalorder %s162, %s163
      %p175 = scmp.eq.s32.totalorder %s27, 1
      %p176 = por %p174, %p175
      %p178 = scmp.ne.s32.totalorder %s163, %s177
      %p179 = scmp.eq.s32.totalorder %s27, 0
      %p180 = por %p178, %p179
      %s181 = ssub.s32 %s21, %s28
      %p182 = scmp.eq.s32.totalorder %s181, 0
      %s184 = sadd.s32 %s183, 1
      %s185 = scalar_select %p182, %s183, %s184
      %p188 = pneg %p182
      %p189 = scmp.eq.s32.totalorder %s21, 1
      %p190 = por %p188, %p189
      %p191 = scmp.ne.s32.totalorder %s183, %s186
      %p192 = scmp.eq.s32.totalorder %s21, 0
      %p193 = por %p191, %p192
      %p194 = scmp.ne.s32.totalorder %s183, %s186
      %p195 = scmp.eq.s32.totalorder %s26, 1
      %p196 = por %p194, %p195
      %p197 = scmp.ne.s32.totalorder %s186, %s187
      %p198 = scmp.eq.s32.totalorder %s26, 0
      %p199 = por %p197, %p198
      %p200 = scmp.ne.s32.totalorder %s186, %s187
      %p201 = scmp.eq.s32.totalorder %s27, 1
      %p202 = por %p200, %p201
      %p204 = scmp.ne.s32.totalorder %s187, %s203
      %p205 = scmp.eq.s32.totalorder %s27, 0
      %p206 = por %p204, %p205
      %p207 = scmp.le.s32.totalorder 1, %s21
      %p208 = scmp.lt.s32.totalorder %s21, 3
      %p209 = pnand %p207, %p208
      %p210 = pneg %p209
      // Predicated region
      $region9: #{tpu_custom_call.1} parent=5 // pred_check
        _
      $region10: #{tpu_custom_call.1} parent=5 // pred_check_branch
        %212 = sbr.rel (%p209) target = $region12
      $region11: #{tpu_custom_call.1} parent=5 // pred_region
        %s213 = ssub.s32 %s21, 1
        // Predicated region
        $region13: #{tpu_custom_call.1} parent=11 // pred_check
          %p214 = pneg %p68
        $region14: #{tpu_custom_call.1} parent=11 // pred_check_branch
          %216 = sbr.rel (%p214) target = $region16
        $region15: #{tpu_custom_call.1} parent=11 // pred_region
          %s218 = ssub.s32 2048, 2048
          %219 = vsyncadd [#allocation6], %s218
          %s220 = sshll.u32 [#allocation5], 4
          %s221 = int_to_ptr.vmem [resolvable:$true] %s220
          %226 = dma.hbm_to_vmem [thread:$0]  %s1, 2048, %s221, [#allocation6], 128, 128, 8
        $region16: #{tpu_custom_call.1} parent=11 // pred_fallthru
          _
        // Predicated region
        $region17: #{tpu_custom_call.1} parent=11 // pred_check
          %p227 = pneg %p89
        $region18: #{tpu_custom_call.1} parent=11 // pred_check_branch
          %229 = sbr.rel (%p227) target = $region20
        $region19: #{tpu_custom_call.1} parent=11 // pred_region
          _
        $region20: #{tpu_custom_call.1} parent=11 // pred_fallthru
          _
        // Predicated region
        $region21: #{tpu_custom_call.1} parent=11 // pred_check
          %p230 = pneg %p110
        $region22: #{tpu_custom_call.1} parent=11 // pred_check_branch
          %232 = sbr.rel (%p230) target = $region24
        $region23: #{tpu_custom_call.1} parent=11 // pred_region
          %s234 = ssub.s32 2048, 2048
          %235 = vsyncadd [#allocation6], %s234
          %s236 = sshll.u32 [#allocation7], 4
          %s237 = int_to_ptr.vmem [resolvable:$true] %s236
          %242 = dma.hbm_to_vmem [thread:$0]  %s3, 2048, %s237, [#allocation6], 128, 128, 8
        $region24: #{tpu_custom_call.1} parent=11 // pred_fallthru
          _
        // Predicated region
        $region25: #{tpu_custom_call.1} parent=11 // pred_check
          %p243 = pneg %p131
        $region26: #{tpu_custom_call.1} parent=11 // pred_check_branch
          %245 = sbr.rel (%p243) target = $region28
        $region27: #{tpu_custom_call.1} parent=11 // pred_region
          _
        $region28: #{tpu_custom_call.1} parent=11 // pred_fallthru
          _
        // Predicated region
        $region29: #{tpu_custom_call.1} parent=11 // pred_check
          %p246 = pneg %p152
        $region30: #{tpu_custom_call.1} parent=11 // pred_check_branch
          %248 = sbr.rel (%p246) target = $region32
        $region31: #{tpu_custom_call.1} parent=11 // pred_region
          %s250 = ssub.s32 2048, 2048
          %251 = vsyncadd [#allocation9], %s250
          %s252 = sshll.u32 [#allocation8], 4
          %s253 = int_to_ptr.vmem [resolvable:$true] %s252
          %258 = dma.hbm_to_vmem [thread:$0]  %s5, 2048, %s253, [#allocation9], 128, 128, 8
        $region32: #{tpu_custom_call.1} parent=11 // pred_fallthru
          _
        // Predicated region
        $region33: #{tpu_custom_call.1} parent=11 // pred_check
          %p259 = pneg %p173
        $region34: #{tpu_custom_call.1} parent=11 // pred_check_branch
          %261 = sbr.rel (%p259) target = $region36
        $region35: #{tpu_custom_call.1} parent=11 // pred_region
          _
        $region36: #{tpu_custom_call.1} parent=11 // pred_fallthru
          _
      $region12: #{tpu_custom_call.1} parent=5 // pred_fallthru
        _
      %p262 = scmp.lt.s32.totalorder %s21, 2
      // Predicated region
      $region37: #{tpu_custom_call.1} parent=5 // pred_check
        %p263 = pneg %p262
      $region38: #{tpu_custom_call.1} parent=5 // pred_check_branch
        %265 = sbr.rel (%p263) target = $region40
      $region39: #{tpu_custom_call.1} parent=5 // pred_region
        // Predicated region
        $region41: #{tpu_custom_call.1} parent=39 // pred_check
          %p266 = pneg %p41
        $region42: #{tpu_custom_call.1} parent=39 // pred_check_branch
          %268 = sbr.rel (%p266) target = $region44
        $region43: #{tpu_custom_call.1} parent=39 // pred_region
          %s269 = sand.u32 %s31, 1
          %s270 = scalar_lea.sflag [#allocation3], %s269
          %s271 = sand.u32 %s31, 1
          %s272 = smul.addr %s271, 64
          %s273 = scalar_lea.vmem [#allocation2], %s272
          %s274 = smul.u32 8, %s21
          %s276 = ssub.s32 1024, 1024
          %277 = vsyncadd %s270, %s276
          %s278 = smul.addr %s274, 128
          %s279 = scalar_lea.hbm %s0, %s278
          %s280 = sshll.u32 %s273, 4
          %s281 = int_to_ptr.vmem [resolvable:$true] %s280
          %286 = dma.hbm_to_vmem [thread:$0]  %s279, 1024, %s281, %s270, 128, 128, 8
        $region44: #{tpu_custom_call.1} parent=39 // pred_fallthru
          _
      $region40: #{tpu_custom_call.1} parent=5 // pred_fallthru
        _
      %p287 = scmp.le.s32.totalorder 1, %s21
      %p288 = scmp.lt.s32.totalorder %s21, 3
      %p289 = pnand %p287, %p288
      %p290 = pneg %p289
      // Predicated region
      $region45: #{tpu_custom_call.1} parent=5 // pred_check
        _
      $region46: #{tpu_custom_call.1} parent=5 // pred_check_branch
        %292 = sbr.rel (%p289) target = $region48
      $region47: #{tpu_custom_call.1} parent=5 // pred_region
        %s293 = ssub.s32 %s21, 1
        %s294 = sand.u32 %s34, 1
        %s295 = scalar_lea.sflag [#allocation3], %s294
        %s296 = sand.u32 %s34, 1
        %s297 = smul.addr %s296, 64
        %s298 = scalar_lea.vmem [#allocation2], %s297
        // Predicated region
        $region49: #{tpu_custom_call.1} parent=47 // pred_check
          %p299 = pneg %p47
        $region50: #{tpu_custom_call.1} parent=47 // pred_check_branch
          %301 = sbr.rel (%p299) target = $region52
        $region51: #{tpu_custom_call.1} parent=47 // pred_region
          %302 = dma.done %s295, 1024
        $region52: #{tpu_custom_call.1} parent=47 // pred_fallthru
          _
        // Predicated region
        $region53: #{tpu_custom_call.1} parent=47 // pred_check
          %p303 = pneg %p68
        $region54: #{tpu_custom_call.1} parent=47 // pred_check_branch
          %305 = sbr.rel (%p303) target = $region56
        $region55: #{tpu_custom_call.1} parent=47 // pred_region
          %306 = dma.done [#allocation6], 2048
        $region56: #{tpu_custom_call.1} parent=47 // pred_fallthru
          _
        // Predicated region
        $region57: #{tpu_custom_call.1} parent=47 // pred_check
          %p307 = pneg %p110
        $region58: #{tpu_custom_call.1} parent=47 // pred_check_branch
          %309 = sbr.rel (%p307) target = $region60
        $region59: #{tpu_custom_call.1} parent=47 // pred_region
          %310 = dma.done [#allocation6], 2048
        $region60: #{tpu_custom_call.1} parent=47 // pred_fallthru
          _
        // Predicated region
        $region61: #{tpu_custom_call.1} parent=47 // pred_check
          %p311 = pneg %p152
        $region62: #{tpu_custom_call.1} parent=47 // pred_check_branch
          %313 = sbr.rel (%p311) target = $region64
        $region63: #{tpu_custom_call.1} parent=47 // pred_region
          %314 = dma.done [#allocation9], 2048
        $region64: #{tpu_custom_call.1} parent=47 // pred_fallthru
          _
        %s315 = sand.u32 %s34, 1
        %s316 = scalar_lea.sflag [#allocation3], %s315
        %s317 = sand.u32 %s34, 1
        %s318 = smul.addr %s317, 64
        %s319 = scalar_lea.vmem [#allocation2], %s318
        %p320 = pneg %p47
        %p321 = pneg %p44
        %p322 = pneg %p68
        %p323 = pneg %p65
        %p324 = pneg %p89
        %p325 = pneg %p86
        %p326 = pneg %p110
        %p327 = pneg %p107
        %p328 = pneg %p131
        %p329 = pneg %p128
        %p330 = pneg %p152
        %p331 = pneg %p149
        %p332 = pneg %p173
        %p333 = pneg %p170
        %p334 = pneg %p199
        %p335 = pneg %p196
        %s336 = sand.u32 %s186, 1
        %s337 = scalar_lea.sflag [#allocation4], %s336
        %s338 = sand.u32 %s186, 1
        %s339 = smul.addr %s338, 64
        %s340 = scalar_lea.vmem [#allocation10], %s339
        %s341 = smul.u32 8, %s26
        %s342 = smul.u32 8, %s26
        %v343 = vld [vmem:[%s298] sm:$0xff]
        %v344 = vld [vmem:[%s298 + $0x8] sm:$0xff]
        %v345 = vld [vmem:[%s298 + $0x10] sm:$0xff]
        %v346 = vld [vmem:[%s298 + $0x18] sm:$0xff]
        %v347 = vld [vmem:[%s298 + $0x20] sm:$0xff]
        %v348 = vld [vmem:[%s298 + $0x28] sm:$0xff]
        %v349 = vld [vmem:[%s298 + $0x30] sm:$0xff]
        %v350 = vld [vmem:[%s298 + $0x38] sm:$0xff]
        %v351 = vld [vmem:[#allocation5] sm:$0xff]
        %v352 = vld [vmem:[#allocation5 + $0x8] sm:$0xff]
        %v353 = vld [vmem:[#allocation5 + $0x10] sm:$0xff]
        %v354 = vld [vmem:[#allocation5 + $0x18] sm:$0xff]
        %v355 = vld [vmem:[#allocation5 + $0x20] sm:$0xff]
        %v356 = vld [vmem:[#allocation5 + $0x28] sm:$0xff]
        %v357 = vld [vmem:[#allocation5 + $0x30] sm:$0xff]
        %v358 = vld [vmem:[#allocation5 + $0x38] sm:$0xff]
        %v359 = vld [vmem:[#allocation5 + $0x40] sm:$0xff]
        %v360 = vld [vmem:[#allocation5 + $0x48] sm:$0xff]
        %v361 = vld [vmem:[#allocation5 + $0x50] sm:$0xff]
        %v362 = vld [vmem:[#allocation5 + $0x58] sm:$0xff]
        %v363 = vld [vmem:[#allocation5 + $0x60] sm:$0xff]
        %v364 = vld [vmem:[#allocation5 + $0x68] sm:$0xff]
        %v365 = vld [vmem:[#allocation5 + $0x70] sm:$0xff]
        %v366 = vld [vmem:[#allocation5 + $0x78] sm:$0xff]
        %v367 = vld [vmem:[%s2] sm:$0x1]
        %v369 = vlaneseq
        %v370 = vshrl.u32 %v369, 7
        %v371 = vsub.s32 0, %v370
        %v372 = vrot.slane %v367, %v371
        %374 = vmatprep.subr.mxu0 0.0
        %375 = vmatpush1.msra.mxu0 %v351
        %376 = vmatprep.subr.mxu0 0.0
        %377 = vmatpush1.msra.mxu0 %v352
        %378 = vmatprep.subr.mxu0 0.0
        %379 = vmatpush1.msra.mxu0 %v353
        %380 = vmatprep.subr.mxu0 0.0
        %381 = vmatpush1.msra.mxu0 %v354
        %382 = vmatprep.subr.mxu0 0.0
        %383 = vmatpush1.msra.mxu0 %v355
        %384 = vmatprep.subr.mxu0 0.0
        %385 = vmatpush1.msra.mxu0 %v356
        %386 = vmatprep.subr.mxu0 0.0
        %387 = vmatpush1.msra.mxu0 %v357
        %388 = vmatprep.subr.mxu0 0.0
        %389 = vmatpush1.msra.mxu0 %v358
        %390 = vmatprep.subr.mxu0 0.0
        %391 = vmatpush1.msra.mxu0 %v359
        %392 = vmatprep.subr.mxu0 0.0
        %393 = vmatpush1.msra.mxu0 %v360
        %394 = vmatprep.subr.mxu0 0.0
        %395 = vmatpush1.msra.mxu0 %v361
        %396 = vmatprep.subr.mxu0 0.0
        %397 = vmatpush1.msra.mxu0 %v362
        %398 = vmatprep.subr.mxu0 0.0
        %399 = vmatpush1.msra.mxu0 %v363
        %400 = vmatprep.subr.mxu0 0.0
        %401 = vmatpush1.msra.mxu0 %v364
        %402 = vmatprep.subr.mxu0 0.0
        %403 = vmatpush1.msra.mxu0 %v365
        %404 = vmatprep.subr.mxu0 0.0
        %405 = vmatpush1.msra.mxu0 %v366
        %406 = vmatprep.subr.mxu0 0.0
        %407 = vmatpush1.msra.mxu0 0.0
        %408 = vmatprep.subr.mxu0 0.0
        %409 = vmatpush1.msra.mxu0 0.0
        %410 = vmatprep.subr.mxu0 0.0
        %411 = vmatpush1.msra.mxu0 0.0
        %412 = vmatprep.subr.mxu0 0.0
        %413 = vmatpush1.msra.mxu0 0.0
        %414 = vmatprep.subr.mxu0 0.0
        %415 = vmatpush1.msra.mxu0 0.0
        %416 = vmatprep.subr.mxu0 0.0
        %417 = vmatpush1.msra.mxu0 0.0
        %418 = vmatprep.subr.mxu0 0.0
        %419 = vmatpush1.msra.mxu0 0.0
        %420 = vmatprep.subr.mxu0 0.0
        %421 = vmatpush1.msra.mxu0 0.0
        %422 = vmatprep.subr.mxu0 0.0
        %423 = vmatpush1.msra.mxu0 0.0
        %424 = vmatprep.subr.mxu0 0.0
        %425 = vmatpush1.msra.mxu0 0.0
        %426 = vmatprep.subr.mxu0 0.0
        %427 = vmatpush1.msra.mxu0 0.0
        %428 = vmatprep.subr.mxu0 0.0
        %429 = vmatpush1.msra.mxu0 0.0
        %430 = vmatprep.subr.mxu0 0.0
        %431 = vmatpush1.msra.mxu0 0.0
        %432 = vmatprep.subr.mxu0 0.0
        %433 = vmatpush1.msra.mxu0 0.0
        %434 = vmatprep.subr.mxu0 0.0
        %435 = vmatpush1.msra.mxu0 0.0
        %436 = vmatprep.subr.mxu0 0.0
        %437 = vmatpush1.msra.mxu0 0.0
        %438 = vmatprep.mubr.f32.mxu0 0.0
        %439 = vmatmul.mubr.f32.gmra.mrb[0].mxu0 %v343
        %v440 = vpop.f32.mrb[0].mxu0
        %v441 = vadd.f32 %v372, %v440
        %v442 = vpop.f32.mrb[0].mxu0
        %443 = vmatprep.mubr.f32.mxu0 0.0
        %444 = vmatmul.mubr.f32.gmra.mrb[0].mxu0 %v344
        %v445 = vpop.f32.mrb[0].mxu0
        %v446 = vadd.f32 %v372, %v445
        %v447 = vpop.f32.mrb[0].mxu0
        %448 = vmatprep.mubr.f32.mxu0 0.0
        %449 = vmatmul.mubr.f32.gmra.mrb[0].mxu0 %v345
        %v450 = vpop.f32.mrb[0].mxu0
        %v451 = vadd.f32 %v372, %v450
        %v452 = vpop.f32.mrb[0].mxu0
        %453 = vmatprep.mubr.f32.mxu0 0.0
        %454 = vmatmul.mubr.f32.gmra.mrb[0].mxu0 %v346
        %v455 = vpop.f32.mrb[0].mxu0
        %v456 = vadd.f32 %v372, %v455
        %v457 = vpop.f32.mrb[0].mxu0
        %458 = vmatprep.mubr.f32.mxu0 0.0
        %459 = vmatmul.mubr.f32.gmra.mrb[0].mxu0 %v347
        %v460 = vpop.f32.mrb[0].mxu0
        %v461 = vadd.f32 %v372, %v460
        %v462 = vpop.f32.mrb[0].mxu0
        %463 = vmatprep.mubr.f32.mxu0 0.0
        %464 = vmatmul.mubr.f32.gmra.mrb[0].mxu0 %v348
        %v465 = vpop.f32.mrb[0].mxu0
        %v466 = vadd.f32 %v372, %v465
        %v467 = vpop.f32.mrb[0].mxu0
        %468 = vmatprep.mubr.f32.mxu0 0.0
        %469 = vmatmul.mubr.f32.gmra.mrb[0].mxu0 %v349
        %v470 = vpop.f32.mrb[0].mxu0
        %v471 = vadd.f32 %v372, %v470
        %v472 = vpop.f32.mrb[0].mxu0
        %473 = vmatprep.mubr.f32.mxu0 0.0
        %474 = vmatmul.mubr.f32.gmra.mrb[0].mxu0 %v350
        %v475 = vpop.f32.mrb[0].mxu0
        %v476 = vadd.f32 %v372, %v475
        %v477 = vpop.f32.mrb[0].mxu0
        %478 = vdwg.mxu0
        %v479 = vxor.u32 %v441, 2147483648
        %v480 = vxor.u32 %v446, 2147483648
        %v481 = vxor.u32 %v451, 2147483648
        %v482 = vxor.u32 %v456, 2147483648
        %v483 = vxor.u32 %v461, 2147483648
        %v484 = vxor.u32 %v466, 2147483648
        %v485 = vxor.u32 %v471, 2147483648
        %v486 = vxor.u32 %v476, 2147483648
        %v487 = vmul.f32 %v479, 1.442695
        %v488 = vpow.pop %v487
        %v489 = vmul.f32 %v480, 1.442695
        %v490 = vpow.pop %v489
        %v491 = vmul.f32 %v481, 1.442695
        %v492 = vpow.pop %v491
        %v493 = vmul.f32 %v482, 1.442695
        %v494 = vpow.pop %v493
        %v495 = vmul.f32 %v483, 1.442695
        %v496 = vpow.pop %v495
        %v497 = vmul.f32 %v484, 1.442695
        %v498 = vpow.pop %v497
        %v499 = vmul.f32 %v485, 1.442695
        %v500 = vpow.pop %v499
        %v501 = vmul.f32 %v486, 1.442695
        %v502 = vpow.pop %v501
        %v503 = vadd.f32 %v488, 1.0
        %v504 = vadd.f32 %v490, 1.0
        %v505 = vadd.f32 %v492, 1.0
        %v506 = vadd.f32 %v494, 1.0
        %v507 = vadd.f32 %v496, 1.0
        %v508 = vadd.f32 %v498, 1.0
        %v509 = vadd.f32 %v500, 1.0
        %v510 = vadd.f32 %v502, 1.0
        %v511 = vrcp.pop %v503
        %v512 = vmul.f32 1.0, %v511
        %v513 = vrcp.pop %v504
        %v514 = vmul.f32 1.0, %v513
        %v515 = vrcp.pop %v505
        %v516 = vmul.f32 1.0, %v515
        %v517 = vrcp.pop %v506
        %v518 = vmul.f32 1.0, %v517
        %v519 = vrcp.pop %v507
        %v520 = vmul.f32 1.0, %v519
        %v521 = vrcp.pop %v508
        %v522 = vmul.f32 1.0, %v521
        %v523 = vrcp.pop %v509
        %v524 = vmul.f32 1.0, %v523
        %v525 = vrcp.pop %v510
        %v526 = vmul.f32 1.0, %v525
        %v527 = vld [vmem:[#allocation7] sm:$0xff]
        %v528 = vld [vmem:[#allocation7 + $0x8] sm:$0xff]
        %v529 = vld [vmem:[#allocation7 + $0x10] sm:$0xff]
        %v530 = vld [vmem:[#allocation7 + $0x18] sm:$0xff]
        %v531 = vld [vmem:[#allocation7 + $0x20] sm:$0xff]
        %v532 = vld [vmem:[#allocation7 + $0x28] sm:$0xff]
        %v533 = vld [vmem:[#allocation7 + $0x30] sm:$0xff]
        %v534 = vld [vmem:[#allocation7 + $0x38] sm:$0xff]
        %v535 = vld [vmem:[#allocation7 + $0x40] sm:$0xff]
        %v536 = vld [vmem:[#allocation7 + $0x48] sm:$0xff]
        %v537 = vld [vmem:[#allocation7 + $0x50] sm:$0xff]
        %v538 = vld [vmem:[#allocation7 + $0x58] sm:$0xff]
        %v539 = vld [vmem:[#allocation7 + $0x60] sm:$0xff]
        %v540 = vld [vmem:[#allocation7 + $0x68] sm:$0xff]
        %v541 = vld [vmem:[#allocation7 + $0x70] sm:$0xff]
        %v542 = vld [vmem:[#allocation7 + $0x78] sm:$0xff]
        %v543 = vld [vmem:[%s4] sm:$0x1]
        %v545 = vlaneseq
        %v546 = vshrl.u32 %v545, 7
        %v547 = vsub.s32 0, %v546
        %v548 = vrot.slane %v543, %v547
        %550 = vmatprep.subr.mxu0 0.0
        %551 = vmatpush1.msra.mxu0 %v527
        %552 = vmatprep.subr.mxu0 0.0
        %553 = vmatpush1.msra.mxu0 %v528
        %554 = vmatprep.subr.mxu0 0.0
        %555 = vmatpush1.msra.mxu0 %v529
        %556 = vmatprep.subr.mxu0 0.0
        %557 = vmatpush1.msra.mxu0 %v530
        %558 = vmatprep.subr.mxu0 0.0
        %559 = vmatpush1.msra.mxu0 %v531
        %560 = vmatprep.subr.mxu0 0.0
        %561 = vmatpush1.msra.mxu0 %v532
        %562 = vmatprep.subr.mxu0 0.0
        %563 = vmatpush1.msra.mxu0 %v533
        %564 = vmatprep.subr.mxu0 0.0
        %565 = vmatpush1.msra.mxu0 %v534
        %566 = vmatprep.subr.mxu0 0.0
        %567 = vmatpush1.msra.mxu0 %v535
        %568 = vmatprep.subr.mxu0 0.0
        %569 = vmatpush1.msra.mxu0 %v536
        %570 = vmatprep.subr.mxu0 0.0
        %571 = vmatpush1.msra.mxu0 %v537
        %572 = vmatprep.subr.mxu0 0.0
        %573 = vmatpush1.msra.mxu0 %v538
        %574 = vmatprep.subr.mxu0 0.0
        %575 = vmatpush1.msra.mxu0 %v539
        %576 = vmatprep.subr.mxu0 0.0
        %577 = vmatpush1.msra.mxu0 %v540
        %578 = vmatprep.subr.mxu0 0.0
        %579 = vmatpush1.msra.mxu0 %v541
        %580 = vmatprep.subr.mxu0 0.0
        %581 = vmatpush1.msra.mxu0 %v542
        %582 = vmatprep.subr.mxu0 0.0
        %583 = vmatpush1.msra.mxu0 0.0
        %584 = vmatprep.subr.mxu0 0.0
        %585 = vmatpush1.msra.mxu0 0.0
        %586 = vmatprep.subr.mxu0 0.0
        %587 = vmatpush1.msra.mxu0 0.0
        %588 = vmatprep.subr.mxu0 0.0
        %589 = vmatpush1.msra.mxu0 0.0
        %590 = vmatprep.subr.mxu0 0.0
        %591 = vmatpush1.msra.mxu0 0.0
        %592 = vmatprep.subr.mxu0 0.0
        %593 = vmatpush1.msra.mxu0 0.0
        %594 = vmatprep.subr.mxu0 0.0
        %595 = vmatpush1.msra.mxu0 0.0
        %596 = vmatprep.subr.mxu0 0.0
        %597 = vmatpush1.msra.mxu0 0.0
        %598 = vmatprep.subr.mxu0 0.0
        %599 = vmatpush1.msra.mxu0 0.0
        %600 = vmatprep.subr.mxu0 0.0
        %601 = vmatpush1.msra.mxu0 0.0
        %602 = vmatprep.subr.mxu0 0.0
        %603 = vmatpush1.msra.mxu0 0.0
        %604 = vmatprep.subr.mxu0 0.0
        %605 = vmatpush1.msra.mxu0 0.0
        %606 = vmatprep.subr.mxu0 0.0
        %607 = vmatpush1.msra.mxu0 0.0
        %608 = vmatprep.subr.mxu0 0.0
        %609 = vmatpush1.msra.mxu0 0.0
        %610 = vmatprep.subr.mxu0 0.0
        %611 = vmatpush1.msra.mxu0 0.0
        %612 = vmatprep.subr.mxu0 0.0
        %613 = vmatpush1.msra.mxu0 0.0
        %614 = vmatprep.mubr.f32.mxu0 0.0
        %615 = vmatmul.mubr.f32.gmra.mrb[0].mxu0 %v512
        %v616 = vpop.f32.mrb[0].mxu0
        %v617 = vadd.f32 %v548, %v616
        %v618 = vpop.f32.mrb[0].mxu0
        %619 = vmatprep.mubr.f32.mxu0 0.0
        %620 = vmatmul.mubr.f32.gmra.mrb[0].mxu0 %v514
        %v621 = vpop.f32.mrb[0].mxu0
        %v622 = vadd.f32 %v548, %v621
        %v623 = vpop.f32.mrb[0].mxu0
        %624 = vmatprep.mubr.f32.mxu0 0.0
        %625 = vmatmul.mubr.f32.gmra.mrb[0].mxu0 %v516
        %v626 = vpop.f32.mrb[0].mxu0
        %v627 = vadd.f32 %v548, %v626
        %v628 = vpop.f32.mrb[0].mxu0
        %629 = vmatprep.mubr.f32.mxu0 0.0
        %630 = vmatmul.mubr.f32.gmra.mrb[0].mxu0 %v518
        %v631 = vpop.f32.mrb[0].mxu0
        %v632 = vadd.f32 %v548, %v631
        %v633 = vpop.f32.mrb[0].mxu0
        %634 = vmatprep.mubr.f32.mxu0 0.0
        %635 = vmatmul.mubr.f32.gmra.mrb[0].mxu0 %v520
        %v636 = vpop.f32.mrb[0].mxu0
        %v637 = vadd.f32 %v548, %v636
        %v638 = vpop.f32.mrb[0].mxu0
        %639 = vmatprep.mubr.f32.mxu0 0.0
        %640 = vmatmul.mubr.f32.gmra.mrb[0].mxu0 %v522
        %v641 = vpop.f32.mrb[0].mxu0
        %v642 = vadd.f32 %v548, %v641
        %v643 = vpop.f32.mrb[0].mxu0
        %644 = vmatprep.mubr.f32.mxu0 0.0
        %645 = vmatmul.mubr.f32.gmra.mrb[0].mxu0 %v524
        %v646 = vpop.f32.mrb[0].mxu0
        %v647 = vadd.f32 %v548, %v646
        %v648 = vpop.f32.mrb[0].mxu0
        %649 = vmatprep.mubr.f32.mxu0 0.0
        %650 = vmatmul.mubr.f32.gmra.mrb[0].mxu0 %v526
        %v651 = vpop.f32.mrb[0].mxu0
        %v652 = vadd.f32 %v548, %v651
        %v653 = vpop.f32.mrb[0].mxu0
        %654 = vdwg.mxu0
        %v655 = vxor.u32 %v617, 2147483648
        %v656 = vxor.u32 %v622, 2147483648
        %v657 = vxor.u32 %v627, 2147483648
        %v658 = vxor.u32 %v632, 2147483648
        %v659 = vxor.u32 %v637, 2147483648
        %v660 = vxor.u32 %v642, 2147483648
        %v661 = vxor.u32 %v647, 2147483648
        %v662 = vxor.u32 %v652, 2147483648
        %v663 = vmul.f32 %v655, 1.442695
        %v664 = vpow.pop %v663
        %v665 = vmul.f32 %v656, 1.442695
        %v666 = vpow.pop %v665
        %v667 = vmul.f32 %v657, 1.442695
        %v668 = vpow.pop %v667
        %v669 = vmul.f32 %v658, 1.442695
        %v670 = vpow.pop %v669
        %v671 = vmul.f32 %v659, 1.442695
        %v672 = vpow.pop %v671
        %v673 = vmul.f32 %v660, 1.442695
        %v674 = vpow.pop %v673
        %v675 = vmul.f32 %v661, 1.442695
        %v676 = vpow.pop %v675
        %v677 = vmul.f32 %v662, 1.442695
        %v678 = vpow.pop %v677
        %v679 = vadd.f32 %v664, 1.0
        %v680 = vadd.f32 %v666, 1.0
        %v681 = vadd.f32 %v668, 1.0
        %v682 = vadd.f32 %v670, 1.0
        %v683 = vadd.f32 %v672, 1.0
        %v684 = vadd.f32 %v674, 1.0
        %v685 = vadd.f32 %v676, 1.0
        %v686 = vadd.f32 %v678, 1.0
        %v687 = vrcp.pop %v679
        %v688 = vmul.f32 1.0, %v687
        %v689 = vrcp.pop %v680
        %v690 = vmul.f32 1.0, %v689
        %v691 = vrcp.pop %v681
        %v692 = vmul.f32 1.0, %v691
        %v693 = vrcp.pop %v682
        %v694 = vmul.f32 1.0, %v693
        %v695 = vrcp.pop %v683
        %v696 = vmul.f32 1.0, %v695
        %v697 = vrcp.pop %v684
        %v698 = vmul.f32 1.0, %v697
        %v699 = vrcp.pop %v685
        %v700 = vmul.f32 1.0, %v699
        %v701 = vrcp.pop %v686
        %v702 = vmul.f32 1.0, %v701
        %v703 = vld [vmem:[#allocation8] sm:$0xff]
        %v704 = vld [vmem:[#allocation8 + $0x8] sm:$0xff]
        %v705 = vld [vmem:[#allocation8 + $0x10] sm:$0xff]
        %v706 = vld [vmem:[#allocation8 + $0x18] sm:$0xff]
        %v707 = vld [vmem:[#allocation8 + $0x20] sm:$0xff]
        %v708 = vld [vmem:[#allocation8 + $0x28] sm:$0xff]
        %v709 = vld [vmem:[#allocation8 + $0x30] sm:$0xff]
        %v710 = vld [vmem:[#allocation8 + $0x38] sm:$0xff]
        %v711 = vld [vmem:[#allocation8 + $0x40] sm:$0xff]
        %v712 = vld [vmem:[#allocation8 + $0x48] sm:$0xff]
        %v713 = vld [vmem:[#allocation8 + $0x50] sm:$0xff]
        %v714 = vld [vmem:[#allocation8 + $0x58] sm:$0xff]
        %v715 = vld [vmem:[#allocation8 + $0x60] sm:$0xff]
        %v716 = vld [vmem:[#allocation8 + $0x68] sm:$0xff]
        %v717 = vld [vmem:[#allocation8 + $0x70] sm:$0xff]
        %v718 = vld [vmem:[#allocation8 + $0x78] sm:$0xff]
        %v719 = vld [vmem:[%s6] sm:$0x1]
        %v721 = vlaneseq
        %v722 = vshrl.u32 %v721, 7
        %v723 = vsub.s32 0, %v722
        %v724 = vrot.slane %v719, %v723
        %726 = vmatprep.subr.mxu0 0.0
        %727 = vmatpush1.msra.mxu0 %v703
        %728 = vmatprep.subr.mxu0 0.0
        %729 = vmatpush1.msra.mxu0 %v704
        %730 = vmatprep.subr.mxu0 0.0
        %731 = vmatpush1.msra.mxu0 %v705
        %732 = vmatprep.subr.mxu0 0.0
        %733 = vmatpush1.msra.mxu0 %v706
        %734 = vmatprep.subr.mxu0 0.0
        %735 = vmatpush1.msra.mxu0 %v707
        %736 = vmatprep.subr.mxu0 0.0
        %737 = vmatpush1.msra.mxu0 %v708
        %738 = vmatprep.subr.mxu0 0.0
        %739 = vmatpush1.msra.mxu0 %v709
        %740 = vmatprep.subr.mxu0 0.0
        %741 = vmatpush1.msra.mxu0 %v710
        %742 = vmatprep.subr.mxu0 0.0
        %743 = vmatpush1.msra.mxu0 %v711
        %744 = vmatprep.subr.mxu0 0.0
        %745 = vmatpush1.msra.mxu0 %v712
        %746 = vmatprep.subr.mxu0 0.0
        %747 = vmatpush1.msra.mxu0 %v713
        %748 = vmatprep.subr.mxu0 0.0
        %749 = vmatpush1.msra.mxu0 %v714
        %750 = vmatprep.subr.mxu0 0.0
        %751 = vmatpush1.msra.mxu0 %v715
        %752 = vmatprep.subr.mxu0 0.0
        %753 = vmatpush1.msra.mxu0 %v716
        %754 = vmatprep.subr.mxu0 0.0
        %755 = vmatpush1.msra.mxu0 %v717
        %756 = vmatprep.subr.mxu0 0.0
        %757 = vmatpush1.msra.mxu0 %v718
        %758 = vmatprep.subr.mxu0 0.0
        %759 = vmatpush1.msra.mxu0 0.0
        %760 = vmatprep.subr.mxu0 0.0
        %761 = vmatpush1.msra.mxu0 0.0
        %762 = vmatprep.subr.mxu0 0.0
        %763 = vmatpush1.msra.mxu0 0.0
        %764 = vmatprep.subr.mxu0 0.0
        %765 = vmatpush1.msra.mxu0 0.0
        %766 = vmatprep.subr.mxu0 0.0
        %767 = vmatpush1.msra.mxu0 0.0
        %768 = vmatprep.subr.mxu0 0.0
        %769 = vmatpush1.msra.mxu0 0.0
        %770 = vmatprep.subr.mxu0 0.0
        %771 = vmatpush1.msra.mxu0 0.0
        %772 = vmatprep.subr.mxu0 0.0
        %773 = vmatpush1.msra.mxu0 0.0
        %774 = vmatprep.subr.mxu0 0.0
        %775 = vmatpush1.msra.mxu0 0.0
        %776 = vmatprep.subr.mxu0 0.0
        %777 = vmatpush1.msra.mxu0 0.0
        %778 = vmatprep.subr.mxu0 0.0
        %779 = vmatpush1.msra.mxu0 0.0
        %780 = vmatprep.subr.mxu0 0.0
        %781 = vmatpush1.msra.mxu0 0.0
        %782 = vmatprep.subr.mxu0 0.0
        %783 = vmatpush1.msra.mxu0 0.0
        %784 = vmatprep.subr.mxu0 0.0
        %785 = vmatpush1.msra.mxu0 0.0
        %786 = vmatprep.subr.mxu0 0.0
        %787 = vmatpush1.msra.mxu0 0.0
        %788 = vmatprep.subr.mxu0 0.0
        %789 = vmatpush1.msra.mxu0 0.0
        %790 = vmatprep.mubr.f32.mxu0 0.0
        %791 = vmatmul.mubr.f32.gmra.mrb[0].mxu0 %v688
        %v792 = vpop.f32.mrb[0].mxu0
        %v793 = vadd.f32 %v724, %v792
        %v794 = vpop.f32.mrb[0].mxu0
        %795 = vmatprep.mubr.f32.mxu0 0.0
        %796 = vmatmul.mubr.f32.gmra.mrb[0].mxu0 %v690
        %v797 = vpop.f32.mrb[0].mxu0
        %v798 = vadd.f32 %v724, %v797
        %v799 = vpop.f32.mrb[0].mxu0
        %800 = vmatprep.mubr.f32.mxu0 0.0
        %801 = vmatmul.mubr.f32.gmra.mrb[0].mxu0 %v692
        %v802 = vpop.f32.mrb[0].mxu0
        %v803 = vadd.f32 %v724, %v802
        %v804 = vpop.f32.mrb[0].mxu0
        %805 = vmatprep.mubr.f32.mxu0 0.0
        %806 = vmatmul.mubr.f32.gmra.mrb[0].mxu0 %v694
        %v807 = vpop.f32.mrb[0].mxu0
        %v808 = vadd.f32 %v724, %v807
        %v809 = vpop.f32.mrb[0].mxu0
        %810 = vmatprep.mubr.f32.mxu0 0.0
        %811 = vmatmul.mubr.f32.gmra.mrb[0].mxu0 %v696
        %v812 = vpop.f32.mrb[0].mxu0
        %v813 = vadd.f32 %v724, %v812
        %v814 = vpop.f32.mrb[0].mxu0
        %815 = vmatprep.mubr.f32.mxu0 0.0
        %816 = vmatmul.mubr.f32.gmra.mrb[0].mxu0 %v698
        %v817 = vpop.f32.mrb[0].mxu0
        %v818 = vadd.f32 %v724, %v817
        %v819 = vpop.f32.mrb[0].mxu0
        %820 = vmatprep.mubr.f32.mxu0 0.0
        %821 = vmatmul.mubr.f32.gmra.mrb[0].mxu0 %v700
        %v822 = vpop.f32.mrb[0].mxu0
        %v823 = vadd.f32 %v724, %v822
        %v824 = vpop.f32.mrb[0].mxu0
        %825 = vmatprep.mubr.f32.mxu0 0.0
        %826 = vmatmul.mubr.f32.gmra.mrb[0].mxu0 %v702
        %v827 = vpop.f32.mrb[0].mxu0
        %v828 = vadd.f32 %v724, %v827
        %v829 = vpop.f32.mrb[0].mxu0
        %830 = vdwg.mxu0
        %831 = vst [vmem:[%s340] sm:$0xff] %v793
        %832 = vst [vmem:[%s340 + $0x8] sm:$0xff] %v798
        %833 = vst [vmem:[%s340 + $0x10] sm:$0xff] %v803
        %834 = vst [vmem:[%s340 + $0x18] sm:$0xff] %v808
        %835 = vst [vmem:[%s340 + $0x20] sm:$0xff] %v813
        %836 = vst [vmem:[%s340 + $0x28] sm:$0xff] %v818
        %837 = vst [vmem:[%s340 + $0x30] sm:$0xff] %v823
        %838 = vst [vmem:[%s340 + $0x38] sm:$0xff] %v828
        %s839 = sand.u32 %s186, 1
        %s840 = scalar_lea.sflag [#allocation4], %s839
        %s841 = sand.u32 %s186, 1
        %s842 = smul.addr %s841, 64
        %s843 = scalar_lea.vmem [#allocation10], %s842
        // Predicated region
        $region65: #{tpu_custom_call.1} parent=47 // pred_check
          %p844 = pneg %p196
        $region66: #{tpu_custom_call.1} parent=47 // pred_check_branch
          %846 = sbr.rel (%p844) target = $region68
        $region67: #{tpu_custom_call.1} parent=47 // pred_region
          %s847 = smul.u32 8, %s26
          %s849 = ssub.s32 1024, 1024
          %850 = vsyncadd %s840, %s849
          %s851 = smul.addr %s847, 128
          %s852 = scalar_lea.hbm %s7, %s851
          %s853 = sshll.u32 %s843, 4
          %s854 = int_to_ptr.vmem [resolvable:$true] %s853
          %859 = dma.vmem_to_hbm [thread:$0]  %s854, 1024, %s852, %s840, 128, 128, 8
        $region68: #{tpu_custom_call.1} parent=47 // pred_fallthru
          _
      $region48: #{tpu_custom_call.1} parent=5 // pred_fallthru
        _
      %p860 = scmp.le.s32.totalorder 2, %s21
      // Predicated region
      $region69: #{tpu_custom_call.1} parent=5 // pred_check
        %p861 = pneg %p860
      $region70: #{tpu_custom_call.1} parent=5 // pred_check_branch
        %863 = sbr.rel (%p861) target = $region72
      $region71: #{tpu_custom_call.1} parent=5 // pred_region
        %s864 = ssub.s32 %s21, 2
        // Predicated region
        $region73: #{tpu_custom_call.1} parent=71 // pred_check
          %p865 = pneg %p202
        $region74: #{tpu_custom_call.1} parent=71 // pred_check_branch
          %867 = sbr.rel (%p865) target = $region76
        $region75: #{tpu_custom_call.1} parent=71 // pred_region
          %s868 = sand.u32 %s187, 1
          %s869 = scalar_lea.sflag [#allocation4], %s868
          %s870 = sand.u32 %s187, 1
          %s871 = smul.addr %s870, 64
          %s872 = scalar_lea.vmem [#allocation10], %s871
          %873 = dma.done %s869, 1024
        $region76: #{tpu_custom_call.1} parent=71 // pred_fallthru
          _
      $region72: #{tpu_custom_call.1} parent=5 // pred_fallthru
        _
    $region6: #{tpu_custom_call.1} parent=1 // loop_footer
      %s25 = sadd.s32 1, %s21
    $region7: #{tpu_custom_call.1} parent=1 // loop_footer_branch
      %20 = sbr.rel target = $region3
    $region8: #{tpu_custom_call.1} parent=1 // loop_exit
      _
    %874 = vsyncpa [#allocation3], 1
    %s875 = scalar_lea.sflag [#allocation3], 1
    %876 = vsyncpa %s875, 1
    %877 = vsyncpa [#allocation6], 1
    %878 = vsyncpa [#allocation9], 1
    %879 = vsyncpa [#allocation4], 1
    %s880 = scalar_lea.sflag [#allocation4], 1
    %881 = vsyncpa %s880, 1

</llo_original>
